<compile_context>
chip_gen: v6e
topology: v6e:2x2x1
jax: 0.10.0
libtpu: 0.0.40
codegen_flags: <defaults>
</compile_context>

<pallas_src>
import jax
import jax.numpy as jnp
from jax.experimental import pallas as pl
from jax.experimental.pallas import tpu as pltpu


_VMEM_LIMIT = 32 * 1024 * 1024  # within scoped-VMEM budget on v5e/v6e/v7x


# --------------------------------------------------------------------------
# Pass 1: Conv2d(kernel_size=1) == row-wise matmul, + BN1 sum / sum-of-squares
# --------------------------------------------------------------------------
def _conv1_stats_kernel(x_ref, w1_ref, y_ref, stats_ref, acc_ref):
    i = pl.program_id(0)

    @pl.when(i == 0)
    def _():
        acc_ref[...] = jnp.zeros_like(acc_ref)

    # Conv bias dropped: a per-channel constant is annihilated by the BN mean.
    y = jnp.dot(x_ref[...], w1_ref[...], preferred_element_type=jnp.float32)
    y_ref[...] = y

    # Single-pass BN statistics (sum, sum of squares) accumulated in VMEM.
    s = jnp.sum(y, axis=0, keepdims=True)
    ss = jnp.sum(y * y, axis=0, keepdims=True)
    acc_ref[...] += jnp.concatenate([s, ss], axis=0)

    @pl.when(i == pl.num_programs(0) - 1)
    def _():
        stats_ref[...] = acc_ref[...]


# --------------------------------------------------------------------------
# Pass 2: apply BN1 + ReLU, 3x3 conv (padding=1) via im2col single fat matmul,
#         + BN2 sum / sum-of-squares
# --------------------------------------------------------------------------
def _shift_w(v, dw):
    # u[:, j, :] = v[:, j+dw, :] with zero padding (dw in {-1, +1}).
    # TODO(synk): pltpu.roll on the sublane axis would avoid these two small
    # slice+concat relayouts; kept as concat for guaranteed semantics.
    H, W, C = v.shape
    zcol = jnp.zeros((H, 1, C), v.dtype)
    if dw < 0:
        return jnp.concatenate([zcol, v[:, :W - 1, :]], axis=1)
    return jnp.concatenate([v[:, 1:, :], zcol], axis=1)


def _shift_h(v, dh):
    # u[i] = v[i+dh] with zero padding; H is an untiled axis -> cheap slicing.
    H = v.shape[0]
    zrow = jnp.zeros_like(v[:1])
    if dh < 0:
        return jnp.concatenate([zrow, v[:H - 1]], axis=0)
    return jnp.concatenate([v[1:], zrow], axis=0)


def _bn1_conv2_stats_kernel(y1_ref, s1_ref, t1_ref, w2_ref,
                            y2_ref, stats_ref, acc_ref):
    n = pl.program_id(0)
    _, H, W, Cmid = y1_ref.shape
    Cout = w2_ref.shape[1]

    @pl.when(n == 0)
    def _():
        acc_ref[...] = jnp.zeros_like(acc_ref)

    # BatchNorm1 (precomputed per-channel scale/shift) + ReLU, applied on load.
    s1 = s1_ref[...].reshape(1, 1, Cmid)
    t1 = t1_ref[...].reshape(1, 1, Cmid)
    a = jnp.maximum(y1_ref[0] * s1 + t1, 0.0)                     # (H, W, Cmid)

    # im2col patches: channel block (kh*3 + kw)*Cmid matches w2col row layout.
    # kw (W) shifts first -> lane-axis concat keeps kw minor; kh handled by
    # cheap H-axis shifts.  One MXU dot with K = 9*Cmid replaces nine K=Cmid dots.
    b = jnp.concatenate([_shift_w(a, -1), a, _shift_w(a, 1)], axis=-1)
    p = jnp.concatenate([_shift_h(b, -1), b, _shift_h(b, 1)], axis=-1)
    z = jnp.dot(p.reshape(H * W, 9 * Cmid), w2_ref[...],
                preferred_element_type=jnp.float32)               # (H*W, Cout)

    y2_ref[...] = z.reshape(1, H, W, Cout)

    s = jnp.sum(z, axis=0, keepdims=True)
    ss = jnp.sum(z * z, axis=0, keepdims=True)
    acc_ref[...] += jnp.concatenate([s, ss], axis=0)

    @pl.when(n == pl.num_programs(0) - 1)
    def _():
        stats_ref[...] = acc_ref[...]


# --------------------------------------------------------------------------
# Pass 3: BN2 + ReLU on a lane-dense (N*H, W*Cout) slab (full 128-lane stores)
# --------------------------------------------------------------------------
def _bn2_relu_kernel(y_ref, s_ref, t_ref, o_ref):
    o_ref[...] = jnp.maximum(y_ref[...] * s_ref[...] + t_ref[...], 0.0)


# --------------------------------------------------------------------------
# Wrappers
# --------------------------------------------------------------------------
def _bn_scale_shift(stats, count, gamma, beta, eps):
    mean = stats[0] / count
    var = jnp.maximum(stats[1] / count - mean * mean, 0.0)   # biased (training)
    scale = gamma * jax.lax.rsqrt(var + eps)
    shift = beta - mean * scale
    return scale, shift                                       # both (1, C)


def double_conv_nhwc(x_nhwc, params, eps=1e-5, *, row_tile=128, out_row_tile=8):
    """NHWC-native DoubleConv forward (training-mode BatchNorm statistics)."""
    w1, b1, g1, be1, w2, b2, g2, be2 = params
    del b1, b2   # conv biases are exactly cancelled by the following BatchNorm
    N, H, W, Cin = x_nhwc.shape
    Cmid = w1.shape[1]
    Cout = w2.shape[2]
    R = N * H * W

    x2d = x_nhwc.reshape(R, Cin).astype(jnp.float32)
    w2col = w2.reshape(9 * Cmid, Cout).astype(jnp.float32)

    # ---- pass 1: 1x1 conv + BN1 stats (row-tiled, pipelined) --------------
    tr = row_tile if (R >= row_tile and R % row_tile == 0) else R
    y1_2d, stats1 = pl.pallas_call(
        _conv1_stats_kernel,
        out_shape=(jax.ShapeDtypeStruct((R, Cmid), jnp.float32),
                   jax.ShapeDtypeStruct((2, Cmid), jnp.float32)),
        grid=(R // tr,),
        in_specs=[pl.BlockSpec((tr, Cin), lambda i: (i, 0)),
                  pl.BlockSpec((Cin, Cmid), lambda i: (0, 0))],
        out_specs=(pl.BlockSpec((tr, Cmid), lambda i: (i, 0)),
                   pl.BlockSpec((2, Cmid), lambda i: (0, 0))),
        scratch_shapes=[pltpu.VMEM((2, Cmid), jnp.float32)],
        compiler_params=pltpu.CompilerParams(
            dimension_semantics=("arbitrary",),          # stats reduction axis
            vmem_limit_bytes=_VMEM_LIMIT),
    )(x2d, w1.astype(jnp.float32))

    scale1, shift1 = _bn_scale_shift(stats1, R, g1, be1, eps)

    # ---- pass 2: BN1+ReLU -> im2col 3x3 conv + BN2 stats (grid over N) ----
    y1_4d = y1_2d.reshape(N, H, W, Cmid)
    y2_4d, stats2 = pl.pallas_call(
        _bn1_conv2_stats_kernel,
        out_shape=(jax.ShapeDtypeStruct((N, H, W, Cout), jnp.float32),
                   jax.ShapeDtypeStruct((2, Cout), jnp.float32)),
        grid=(N,),
        in_specs=[pl.BlockSpec((1, H, W, Cmid), lambda n: (n, 0, 0, 0)),
                  pl.BlockSpec((1, Cmid), lambda n: (0, 0)),
                  pl.BlockSpec((1, Cmid), lambda n: (0, 0)),
                  pl.BlockSpec((9 * Cmid, Cout), lambda n: (0, 0))],
        out_specs=(pl.BlockSpec((1, H, W, Cout), lambda n: (n, 0, 0, 0)),
                   pl.BlockSpec((2, Cout), lambda n: (0, 0))),
        scratch_shapes=[pltpu.VMEM((2, Cout), jnp.float32)],
        compiler_params=pltpu.CompilerParams(
            dimension_semantics=("arbitrary",),          # stats reduction axis
            vmem_limit_bytes=_VMEM_LIMIT),
    )(y1_4d, scale1, shift1, w2col)

    scale2, shift2 = _bn_scale_shift(stats2, R, g2, be2, eps)

    # ---- pass 3: BN2 + ReLU, lane-dense output slab -----------------------
    NH, WC = N * H, W * Cout
    y2_packed = y2_4d.reshape(NH, WC)                 # contiguous -> free reshape
    s2_packed = jnp.tile(scale2.reshape(-1), W).reshape(1, WC)
    t2_packed = jnp.tile(shift2.reshape(-1), W).reshape(1, WC)
    tro = out_row_tile if (NH >= out_row_tile and NH % out_row_tile == 0) else NH
    out_packed = pl.pallas_call(
        _bn2_relu_kernel,
        out_shape=jax.ShapeDtypeStruct((NH, WC), jnp.float32),
        grid=(NH // tro,),
        in_specs=[pl.BlockSpec((tro, WC), lambda i: (i, 0)),
                  pl.BlockSpec((1, WC), lambda i: (0, 0)),
                  pl.BlockSpec((1, WC), lambda i: (0, 0))],
        out_specs=pl.BlockSpec((tro, WC), lambda i: (i, 0)),
        compiler_params=pltpu.CompilerParams(
            dimension_semantics=("parallel",),           # shards over v7x cores
            vmem_limit_bytes=_VMEM_LIMIT),
    )(y2_packed, s2_packed, t2_packed)

    return out_packed.reshape(N, H, W, Cout)


def double_conv(x_nchw, params, eps=1e-5):
    """PyTorch-layout entry point: (N, in_ch+mid_ch, H, W) -> (N, out_ch, H, W).
    NHWC-native callers should use double_conv_nhwc to skip the transposes."""
    x_nhwc = jnp.transpose(x_nchw, (0, 2, 3, 1))
    out_nhwc = double_conv_nhwc(x_nhwc, params, eps)
    return jnp.transpose(out_nhwc, (0, 3, 1, 2))


# --------------------------------------------------------------------------
# Pure-JAX reference (keeps the conv biases; they are mathematically inert)
# --------------------------------------------------------------------------
def double_conv_reference(x_nchw, params, eps=1e-5):
    w1, b1, g1, be1, w2, b2, g2, be2 = params
    Cmid, Cout = w1.shape[1], w2.shape[2]
    x = jnp.transpose(x_nchw, (0, 2, 3, 1)).astype(jnp.float32)
    y = jnp.einsum('nhwc,cd->nhwd', x, w1) + b1[0]
    m = y.mean(axis=(0, 1, 2)); v = ((y - m) ** 2).mean(axis=(0, 1, 2))
    y = jnp.maximum((y - m) * jax.lax.rsqrt(v + eps) * g1[0] + be1[0], 0.0)
    w2_hwio = w2.reshape(3, 3, Cmid, Cout)
    y2 = jax.lax.conv_general_dilated(
        y, w2_hwio, (1, 1), 'SAME',
        dimension_numbers=('NHWC', 'HWIO', 'NHWC')) + b2[0]
    m2 = y2.mean(axis=(0, 1, 2)); v2 = ((y2 - m2) ** 2).mean(axis=(0, 1, 2))
    y2 = jnp.maximum((y2 - m2) * jax.lax.rsqrt(v2 + eps) * g2[0] + be2[0], 0.0)
    return jnp.transpose(y2, (0, 3, 1, 2))


def make_params(key, in_ch, mid_ch, out_ch):
    """conv1 weight: PyTorch (mid, in_ch+mid, 1, 1) stored as (in_ch+mid, mid)
       conv2 weight: PyTorch (out, mid, 3, 3)       stored as (9, mid, out) [kh*3+kw]."""
    cin = in_ch + mid_ch
    ks = jax.random.split(key, 8)
    w1 = 0.3 * jax.random.normal(ks[0], (cin, mid_ch), jnp.float32)
    b1 = 0.1 * jax.random.normal(ks[1], (1, mid_ch), jnp.float32)
    g1 = 1.0 + 0.1 * jax.random.normal(ks[2], (1, mid_ch), jnp.float32)
    be1 = 0.1 * jax.random.normal(ks[3], (1, mid_ch), jnp.float32)
    w2 = 0.2 * jax.random.normal(ks[4], (9, mid_ch, out_ch), jnp.float32)
    b2 = 0.1 * jax.random.normal(ks[5], (1, out_ch), jnp.float32)
    g2 = 1.0 + 0.1 * jax.random.normal(ks[6], (1, out_ch), jnp.float32)
    be2 = 0.1 * jax.random.normal(ks[7], (1, out_ch), jnp.float32)
    return (w1, b1, g1, be1, w2, b2, g2, be2)


if __name__ == "__main__":
    in_ch, mid_ch, out_ch = 4, 8, 8
    N, H, W = 2, 16, 16

    key = jax.random.PRNGKey(0)
    kp, kx = jax.random.split(key)
    params = make_params(kp, in_ch, mid_ch, out_ch)
    # DoubleConv's first conv expects in_ch + mid_ch input channels.
    x = jax.random.normal(kx, (N, in_ch + mid_ch, H, W), jnp.float32)

    out = jax.block_until_ready(jax.jit(double_conv)(x, params))
    ref = jax.block_until_ready(double_conv_reference(x, params))

    assert out.shape == (N, out_ch, H, W), out.shape
    max_err = float(jnp.max(jnp.abs(out - ref)))
    assert jnp.allclose(out, ref, rtol=1e-4, atol=2e-4), max_err
    print("KERNEL_OK")
</pallas_src>

<mosaic_0001>
module attributes {stable_mosaic.version = 11 : i64} {
  func.func @_conv1_stats_kernel(%arg0: i32, %arg1: memref<128x12xf32, #tpu.memory_space<vmem>>, %arg2: memref<12x8xf32, #tpu.memory_space<vmem>>, %arg3: memref<128x8xf32, #tpu.memory_space<vmem>>, %arg4: memref<2x8xf32, #tpu.memory_space<vmem>>, %arg5: memref<2x8xf32, #tpu.memory_space<vmem>>) attributes {dimension_semantics = [#tpu.dimension_semantics<arbitrary>], iteration_bounds = array<i64: 4>, scalar_prefetch = 0 : i64, scratch_operands = 1 : i64, tpu.core_type = #tpu.core_type<tc>, window_params = [{transform_indices = @transform_0, window_bounds = array<i64: 128, 12>}, {pipeline_mode = #tpu.pipeline_mode<synchronous>, transform_indices = @transform_1, window_bounds = array<i64: 12, 8>}, {transform_indices = @transform_2, window_bounds = array<i64: 128, 8>}, {pipeline_mode = #tpu.pipeline_mode<synchronous>, transform_indices = @transform_3, window_bounds = array<i64: 2, 8>}]} {
    %c0_i32 = arith.constant 0 : i32
    %0 = arith.cmpi eq, %arg0, %c0_i32 : i32
    %1 = arith.extui %0 : i1 to i32
    %c0_i32_0 = arith.constant 0 : i32
    %2 = arith.cmpi ne, %1, %c0_i32_0 : i32
    scf.if %2 {
      %cst_13 = arith.constant 0.000000e+00 : f32
      %19 = vector.broadcast %cst_13 : f32 to vector<2x8xf32>
      %c0_14 = arith.constant 0 : index
      %c0_15 = arith.constant 0 : index
      %20 = vector.load %arg5[%c0_14, %c0_15] : memref<2x8xf32, #tpu.memory_space<vmem>>, vector<2x8xf32>
      tpu.vector_store %arg5[%c0_14, %c0_15], %19 {strides = array<i32>} : memref<2x8xf32, #tpu.memory_space<vmem>>, vector<2x8xf32>,
    } else {
    }
    %c0 = arith.constant 0 : index
    %c0_1 = arith.constant 0 : index
    %3 = vector.load %arg1[%c0, %c0_1] : memref<128x12xf32, #tpu.memory_space<vmem>>, vector<128x12xf32>
    %c0_2 = arith.constant 0 : index
    %c0_3 = arith.constant 0 : index
    %4 = vector.load %arg2[%c0_2, %c0_3] : memref<12x8xf32, #tpu.memory_space<vmem>>, vector<12x8xf32>
    %cst = arith.constant dense<0.000000e+00> : vector<128x8xf32>
    %5 = tpu.matmul %3, %4, %cst {dimension_numbers = #tpu.dot_dimension_numbers<[1], [0], [0], [1], [0, 0, 1, 1], [], []>} : vector<128x12xf32>, vector<12x8xf32>, vector<128x8xf32> -> vector<128x8xf32>
    %c0_4 = arith.constant 0 : index
    %c0_5 = arith.constant 0 : index
    %6 = vector.load %arg3[%c0_4, %c0_5] : memref<128x8xf32, #tpu.memory_space<vmem>>, vector<128x8xf32>
    tpu.vector_store %arg3[%c0_4, %c0_5], %5 {strides = array<i32>} : memref<128x8xf32, #tpu.memory_space<vmem>>, vector<128x8xf32>,
    %cst_6 = arith.constant dense<0.000000e+00> : vector<8xf32>
    %7 = vector.multi_reduction <add>, %5, %cst_6 [0] : vector<128x8xf32> to vector<8xf32>
    %8 = vector.shape_cast %7 : vector<8xf32> to vector<1x8xf32>
    %9 = arith.mulf %5, %5 : vector<128x8xf32>
    %cst_7 = arith.constant dense<0.000000e+00> : vector<8xf32>
    %10 = vector.multi_reduction <add>, %9, %cst_7 [0] : vector<128x8xf32> to vector<8xf32>
    %11 = vector.shape_cast %10 : vector<8xf32> to vector<1x8xf32>
    %c0_8 = arith.constant 0 : index
    %c0_9 = arith.constant 0 : index
    %12 = vector.load %arg5[%c0_8, %c0_9] : memref<2x8xf32, #tpu.memory_space<vmem>>, vector<2x8xf32>
    %13 = tpu.concatenate %8, %11 in 0 : vector<1x8xf32>, vector<1x8xf32> -> vector<2x8xf32>
    %14 = arith.addf %12, %13 : vector<2x8xf32>
    %c0_10 = arith.constant 0 : index
    %c0_11 = arith.constant 0 : index
    %15 = vector.load %arg5[%c0_10, %c0_11] : memref<2x8xf32, #tpu.memory_space<vmem>>, vector<2x8xf32>
    tpu.vector_store %arg5[%c0_10, %c0_11], %14 {strides = array<i32>} : memref<2x8xf32, #tpu.memory_space<vmem>>, vector<2x8xf32>,
    %c3_i32 = arith.constant 3 : i32
    %16 = arith.cmpi eq, %arg0, %c3_i32 : i32
    %17 = arith.extui %16 : i1 to i32
    %c0_i32_12 = arith.constant 0 : i32
    %18 = arith.cmpi ne, %17, %c0_i32_12 : i32
    scf.if %18 {
      %c0_13 = arith.constant 0 : index
      %c0_14 = arith.constant 0 : index
      %19 = vector.load %arg5[%c0_13, %c0_14] : memref<2x8xf32, #tpu.memory_space<vmem>>, vector<2x8xf32>
      %c0_15 = arith.constant 0 : index
      %c0_16 = arith.constant 0 : index
      %20 = vector.load %arg4[%c0_15, %c0_16] : memref<2x8xf32, #tpu.memory_space<vmem>>, vector<2x8xf32>
      tpu.vector_store %arg4[%c0_15, %c0_16], %19 {strides = array<i32>} : memref<2x8xf32, #tpu.memory_space<vmem>>, vector<2x8xf32>,
    } else {
    }
    return
  }
  func.func @transform_0(%arg0: i32) -> (i32, i32) {
    %c0_i32 = arith.constant 0 : i32
    %c0_i32_0 = arith.constant 0 : i32
    return %arg0, %c0_i32 : i32, i32
  }
  func.func @transform_1(%arg0: i32) -> (i32, i32) {
    %c0_i32 = arith.constant 0 : i32
    %c0_i32_0 = arith.constant 0 : i32
    %c0_i32_1 = arith.constant 0 : i32
    return %c0_i32, %c0_i32_0 : i32, i32
  }
  func.func @transform_2(%arg0: i32) -> (i32, i32) {
    %c0_i32 = arith.constant 0 : i32
    %c0_i32_0 = arith.constant 0 : i32
    return %arg0, %c0_i32 : i32, i32
  }
  func.func @transform_3(%arg0: i32) -> (i32, i32) {
    %c0_i32 = arith.constant 0 : i32
    %c0_i32_0 = arith.constant 0 : i32
    %c0_i32_1 = arith.constant 0 : i32
    return %c0_i32, %c0_i32_0 : i32, i32
  }
}

module attributes {stable_mosaic.version = 11 : i64} {
  func.func @_bn1_conv2_stats_kernel(%arg0: i32, %arg1: memref<1x16x16x8xf32, #tpu.memory_space<vmem>>, %arg2: memref<1x8xf32, #tpu.memory_space<vmem>>, %arg3: memref<1x8xf32, #tpu.memory_space<vmem>>, %arg4: memref<72x8xf32, #tpu.memory_space<vmem>>, %arg5: memref<1x16x16x8xf32, #tpu.memory_space<vmem>>, %arg6: memref<2x8xf32, #tpu.memory_space<vmem>>, %arg7: memref<2x8xf32, #tpu.memory_space<vmem>>) attributes {dimension_semantics = [#tpu.dimension_semantics<arbitrary>], iteration_bounds = array<i64: 2>, scalar_prefetch = 0 : i64, scratch_operands = 1 : i64, tpu.core_type = #tpu.core_type<tc>, window_params = [{transform_indices = @transform_0, window_bounds = array<i64: 1, 16, 16, 8>}, {pipeline_mode = #tpu.pipeline_mode<synchronous>, transform_indices = @transform_1, window_bounds = array<i64: 1, 8>}, {pipeline_mode = #tpu.pipeline_mode<synchronous>, transform_indices = @transform_2, window_bounds = array<i64: 1, 8>}, {pipeline_mode = #tpu.pipeline_mode<synchronous>, transform_indices = @transform_3, window_bounds = array<i64: 72, 8>}, {transform_indices = @transform_4, window_bounds = array<i64: 1, 16, 16, 8>}, {pipeline_mode = #tpu.pipeline_mode<synchronous>, transform_indices = @transform_5, window_bounds = array<i64: 2, 8>}]} {
    %c0_i32 = arith.constant 0 : i32
    %0 = arith.cmpi eq, %arg0, %c0_i32 : i32
    %1 = arith.extui %0 : i1 to i32
    %c0_i32_0 = arith.constant 0 : i32
    %2 = arith.cmpi ne, %1, %c0_i32_0 : i32
    scf.if %2 {
      %cst_26 = arith.constant 0.000000e+00 : f32
      %46 = vector.broadcast %cst_26 : f32 to vector<2x8xf32>
      %c0_27 = arith.constant 0 : index
      %c0_28 = arith.constant 0 : index
      %47 = vector.load %arg7[%c0_27, %c0_28] : memref<2x8xf32, #tpu.memory_space<vmem>>, vector<2x8xf32>
      tpu.vector_store %arg7[%c0_27, %c0_28], %46 {strides = array<i32>} : memref<2x8xf32, #tpu.memory_space<vmem>>, vector<2x8xf32>,
    } else {
    }
    %c0 = arith.constant 0 : index
    %c0_1 = arith.constant 0 : index
    %3 = vector.load %arg2[%c0, %c0_1] : memref<1x8xf32, #tpu.memory_space<vmem>>, vector<1x8xf32>
    %4 = vector.shape_cast %3 : vector<1x8xf32> to vector<1x1x8xf32>
    %c0_2 = arith.constant 0 : index
    %c0_3 = arith.constant 0 : index
    %5 = vector.load %arg3[%c0_2, %c0_3] : memref<1x8xf32, #tpu.memory_space<vmem>>, vector<1x8xf32>
    %6 = vector.shape_cast %5 : vector<1x8xf32> to vector<1x1x8xf32>
    %c0_4 = arith.constant 0 : index
    %c0_5 = arith.constant 0 : index
    %c0_6 = arith.constant 0 : index
    %c0_7 = arith.constant 0 : index
    %7 = vector.load %arg1[%c0_4, %c0_5, %c0_6, %c0_7] : memref<1x16x16x8xf32, #tpu.memory_space<vmem>>, vector<1x16x16x8xf32>
    %8 = vector.shape_cast %7 : vector<1x16x16x8xf32> to vector<16x16x8xf32>
    %9 = vector.broadcast %4 : vector<1x1x8xf32> to vector<16x16x8xf32>
    %10 = arith.mulf %8, %9 : vector<16x16x8xf32>
    %11 = vector.broadcast %6 : vector<1x1x8xf32> to vector<16x16x8xf32>
    %12 = arith.addf %10, %11 : vector<16x16x8xf32>
    %cst = arith.constant 0.000000e+00 : f32
    %13 = vector.broadcast %cst : f32 to vector<16x16x8xf32>
    %14 = arith.maximumf %12, %13 : vector<16x16x8xf32>
    %cst_8 = arith.constant 0.000000e+00 : f32
    %15 = vector.broadcast %cst_8 : f32 to vector<16x1x8xf32>
    %16 = vector.extract_strided_slice %14 {offsets = [0, 0, 0], sizes = [16, 15, 8], strides = [1, 1, 1]} : vector<16x16x8xf32> to vector<16x15x8xf32>
    %17 = tpu.concatenate %15, %16 in 1 : vector<16x1x8xf32>, vector<16x15x8xf32> -> vector<16x16x8xf32>
    %cst_9 = arith.constant 0.000000e+00 : f32
    %18 = vector.broadcast %cst_9 : f32 to vector<16x1x8xf32>
    %19 = vector.extract_strided_slice %14 {offsets = [0, 1, 0], sizes = [16, 15, 8], strides = [1, 1, 1]} : vector<16x16x8xf32> to vector<16x15x8xf32>
    %20 = tpu.concatenate %19, %18 in 1 : vector<16x15x8xf32>, vector<16x1x8xf32> -> vector<16x16x8xf32>
    %21 = tpu.concatenate %17, %14, %20 in 2 : vector<16x16x8xf32>, vector<16x16x8xf32>, vector<16x16x8xf32> -> vector<16x16x24xf32>
    %cst_10 = arith.constant 0.000000e+00 : f32
    %22 = vector.broadcast %cst_10 : f32 to vector<1x16x24xf32>
    %23 = vector.extract_strided_slice %21 {offsets = [0, 0, 0], sizes = [15, 16, 24], strides = [1, 1, 1]} : vector<16x16x24xf32> to vector<15x16x24xf32>
    %24 = tpu.concatenate %22, %23 in 0 : vector<1x16x24xf32>, vector<15x16x24xf32> -> vector<16x16x24xf32>
    %cst_11 = arith.constant 0.000000e+00 : f32
    %25 = vector.broadcast %cst_11 : f32 to vector<1x16x24xf32>
    %26 = vector.extract_strided_slice %21 {offsets = [1, 0, 0], sizes = [15, 16, 24], strides = [1, 1, 1]} : vector<16x16x24xf32> to vector<15x16x24xf32>
    %27 = tpu.concatenate %26, %25 in 0 : vector<15x16x24xf32>, vector<1x16x24xf32> -> vector<16x16x24xf32>
    %28 = tpu.concatenate %24, %21, %27 in 2 : vector<16x16x24xf32>, vector<16x16x24xf32>, vector<16x16x24xf32> -> vector<16x16x72xf32>
    %29 = vector.shape_cast %28 : vector<16x16x72xf32> to vector<256x72xf32>
    %c0_12 = arith.constant 0 : index
    %c0_13 = arith.constant 0 : index
    %30 = vector.load %arg4[%c0_12, %c0_13] : memref<72x8xf32, #tpu.memory_space<vmem>>, vector<72x8xf32>
    %cst_14 = arith.constant dense<0.000000e+00> : vector<256x8xf32>
    %31 = tpu.matmul %29, %30, %cst_14 {dimension_numbers = #tpu.dot_dimension_numbers<[1], [0], [0], [1], [0, 0, 1, 1], [], []>} : vector<256x72xf32>, vector<72x8xf32>, vector<256x8xf32> -> vector<256x8xf32>
    %32 = vector.shape_cast %31 : vector<256x8xf32> to vector<1x16x16x8xf32>
    %c0_15 = arith.constant 0 : index
    %c0_16 = arith.constant 0 : index
    %c0_17 = arith.constant 0 : index
    %c0_18 = arith.constant 0 : index
    %33 = vector.load %arg5[%c0_15, %c0_16, %c0_17, %c0_18] : memref<1x16x16x8xf32, #tpu.memory_space<vmem>>, vector<1x16x16x8xf32>
    tpu.vector_store %arg5[%c0_15, %c0_16, %c0_17, %c0_18], %32 {strides = array<i32>} : memref<1x16x16x8xf32, #tpu.memory_space<vmem>>, vector<1x16x16x8xf32>,
    %cst_19 = arith.constant dense<0.000000e+00> : vector<8xf32>
    %34 = vector.multi_reduction <add>, %31, %cst_19 [0] : vector<256x8xf32> to vector<8xf32>
    %35 = vector.shape_cast %34 : vector<8xf32> to vector<1x8xf32>
    %36 = arith.mulf %31, %31 : vector<256x8xf32>
    %cst_20 = arith.constant dense<0.000000e+00> : vector<8xf32>
    %37 = vector.multi_reduction <add>, %36, %cst_20 [0] : vector<256x8xf32> to vector<8xf32>
    %38 = vector.shape_cast %37 : vector<8xf32> to vector<1x8xf32>
    %c0_21 = arith.constant 0 : index
    %c0_22 = arith.constant 0 : index
    %39 = vector.load %arg7[%c0_21, %c0_22] : memref<2x8xf32, #tpu.memory_space<vmem>>, vector<2x8xf32>
    %40 = tpu.concatenate %35, %38 in 0 : vector<1x8xf32>, vector<1x8xf32> -> vector<2x8xf32>
    %41 = arith.addf %39, %40 : vector<2x8xf32>
    %c0_23 = arith.constant 0 : index
    %c0_24 = arith.constant 0 : index
    %42 = vector.load %arg7[%c0_23, %c0_24] : memref<2x8xf32, #tpu.memory_space<vmem>>, vector<2x8xf32>
    tpu.vector_store %arg7[%c0_23, %c0_24], %41 {strides = array<i32>} : memref<2x8xf32, #tpu.memory_space<vmem>>, vector<2x8xf32>,
    %c1_i32 = arith.constant 1 : i32
    %43 = arith.cmpi eq, %arg0, %c1_i32 : i32
    %44 = arith.extui %43 : i1 to i32
    %c0_i32_25 = arith.constant 0 : i32
    %45 = arith.cmpi ne, %44, %c0_i32_25 : i32
    scf.if %45 {
      %c0_26 = arith.constant 0 : index
      %c0_27 = arith.constant 0 : index
      %46 = vector.load %arg7[%c0_26, %c0_27] : memref<2x8xf32, #tpu.memory_space<vmem>>, vector<2x8xf32>
      %c0_28 = arith.constant 0 : index
      %c0_29 = arith.constant 0 : index
      %47 = vector.load %arg6[%c0_28, %c0_29] : memref<2x8xf32, #tpu.memory_space<vmem>>, vector<2x8xf32>
      tpu.vector_store %arg6[%c0_28, %c0_29], %46 {strides = array<i32>} : memref<2x8xf32, #tpu.memory_space<vmem>>, vector<2x8xf32>,
    } else {
    }
    return
  }
  func.func @transform_0(%arg0: i32) -> (i32, i32, i32, i32) {
    %c0_i32 = arith.constant 0 : i32
    %c0_i32_0 = arith.constant 0 : i32
    %c0_i32_1 = arith.constant 0 : i32
    %c0_i32_2 = arith.constant 0 : i32
    return %arg0, %c0_i32, %c0_i32_0, %c0_i32_1 : i32, i32, i32, i32
  }
  func.func @transform_1(%arg0: i32) -> (i32, i32) {
    %c0_i32 = arith.constant 0 : i32
    %c0_i32_0 = arith.constant 0 : i32
    %c0_i32_1 = arith.constant 0 : i32
    return %c0_i32, %c0_i32_0 : i32, i32
  }
  func.func @transform_2(%arg0: i32) -> (i32, i32) {
    %c0_i32 = arith.constant 0 : i32
    %c0_i32_0 = arith.constant 0 : i32
    %c0_i32_1 = arith.constant 0 : i32
    return %c0_i32, %c0_i32_0 : i32, i32
  }
  func.func @transform_3(%arg0: i32) -> (i32, i32) {
    %c0_i32 = arith.constant 0 : i32
    %c0_i32_0 = arith.constant 0 : i32
    %c0_i32_1 = arith.constant 0 : i32
    return %c0_i32, %c0_i32_0 : i32, i32
  }
  func.func @transform_4(%arg0: i32) -> (i32, i32, i32, i32) {
    %c0_i32 = arith.constant 0 : i32
    %c0_i32_0 = arith.constant 0 : i32
    %c0_i32_1 = arith.constant 0 : i32
    %c0_i32_2 = arith.constant 0 : i32
    return %arg0, %c0_i32, %c0_i32_0, %c0_i32_1 : i32, i32, i32, i32
  }
  func.func @transform_5(%arg0: i32) -> (i32, i32) {
    %c0_i32 = arith.constant 0 : i32
    %c0_i32_0 = arith.constant 0 : i32
    %c0_i32_1 = arith.constant 0 : i32
    return %c0_i32, %c0_i32_0 : i32, i32
  }
}

module attributes {stable_mosaic.version = 11 : i64} {
  func.func @_bn2_relu_kernel(%arg0: i32, %arg1: memref<8x128xf32, #tpu.memory_space<vmem>>, %arg2: memref<1x128xf32, #tpu.memory_space<vmem>>, %arg3: memref<1x128xf32, #tpu.memory_space<vmem>>, %arg4: memref<8x128xf32, #tpu.memory_space<vmem>>) attributes {dimension_semantics = [#tpu.dimension_semantics<parallel>], iteration_bounds = array<i64: 4>, scalar_prefetch = 0 : i64, scratch_operands = 0 : i64, tpu.core_type = #tpu.core_type<tc>, window_params = [{transform_indices = @transform_0, window_bounds = array<i64: 8, 128>}, {pipeline_mode = #tpu.pipeline_mode<synchronous>, transform_indices = @transform_1, window_bounds = array<i64: 1, 128>}, {pipeline_mode = #tpu.pipeline_mode<synchronous>, transform_indices = @transform_2, window_bounds = array<i64: 1, 128>}, {transform_indices = @transform_3, window_bounds = array<i64: 8, 128>}]} {
    %c0 = arith.constant 0 : index
    %c0_0 = arith.constant 0 : index
    %0 = vector.load %arg1[%c0, %c0_0] : memref<8x128xf32, #tpu.memory_space<vmem>>, vector<8x128xf32>
    %c0_1 = arith.constant 0 : index
    %c0_2 = arith.constant 0 : index
    %1 = vector.load %arg2[%c0_1, %c0_2] : memref<1x128xf32, #tpu.memory_space<vmem>>, vector<1x128xf32>
    %2 = vector.broadcast %1 : vector<1x128xf32> to vector<8x128xf32>
    %3 = arith.mulf %0, %2 : vector<8x128xf32>
    %c0_3 = arith.constant 0 : index
    %c0_4 = arith.constant 0 : index
    %4 = vector.load %arg3[%c0_3, %c0_4] : memref<1x128xf32, #tpu.memory_space<vmem>>, vector<1x128xf32>
    %5 = vector.broadcast %4 : vector<1x128xf32> to vector<8x128xf32>
    %6 = arith.addf %3, %5 : vector<8x128xf32>
    %cst = arith.constant 0.000000e+00 : f32
    %7 = vector.broadcast %cst : f32 to vector<8x128xf32>
    %8 = arith.maximumf %6, %7 : vector<8x128xf32>
    %c0_5 = arith.constant 0 : index
    %c0_6 = arith.constant 0 : index
    %9 = vector.load %arg4[%c0_5, %c0_6] : memref<8x128xf32, #tpu.memory_space<vmem>>, vector<8x128xf32>
    tpu.vector_store %arg4[%c0_5, %c0_6], %8 {strides = array<i32>} : memref<8x128xf32, #tpu.memory_space<vmem>>, vector<8x128xf32>,
    return
  }
  func.func @transform_0(%arg0: i32) -> (i32, i32) {
    %c0_i32 = arith.constant 0 : i32
    %c0_i32_0 = arith.constant 0 : i32
    return %arg0, %c0_i32 : i32, i32
  }
  func.func @transform_1(%arg0: i32) -> (i32, i32) {
    %c0_i32 = arith.constant 0 : i32
    %c0_i32_0 = arith.constant 0 : i32
    %c0_i32_1 = arith.constant 0 : i32
    return %c0_i32, %c0_i32_0 : i32, i32
  }
  func.func @transform_2(%arg0: i32) -> (i32, i32) {
    %c0_i32 = arith.constant 0 : i32
    %c0_i32_0 = arith.constant 0 : i32
    %c0_i32_1 = arith.constant 0 : i32
    return %c0_i32, %c0_i32_0 : i32, i32
  }
  func.func @transform_3(%arg0: i32) -> (i32, i32) {
    %c0_i32 = arith.constant 0 : i32
    %c0_i32_0 = arith.constant 0 : i32
    return %arg0, %c0_i32 : i32, i32
  }
}

</mosaic_0001>

<llo_original>
// kernel: tile.10
$region0: #{tile.10}
  #allocation0 [shape = 's32[1]{0}', space=sflag, size = 0x4, scoped, tag = 'scoped memory for tile.10']
  %s0 = inlined_call_operand.vmem [shape: f32[8], index: 0, kind: input, shape index: {}]
  %s1 = inlined_call_operand.vmem [shape: f32[16,8], index: 1, kind: output, shape index: {}]
  // Predicated region
  $region2: #{tile.10} parent=0 // pred_check
    _
  $region3: #{tile.10} parent=0 // pred_check_branch
    %3 = sbr.rel (0) target = $region5
  $region4: #{tile.10} parent=0 // pred_region
    _
  $region5: #{tile.10} parent=0 // pred_fallthru
    _
  %v4 = vld [vmem:[%s0] ss:$0 sm:$0xff]
  %5 = vst [vmem:[%s1] sm:$0xff] %v4
  %s6 = scalar_lea.vmem %s1, 8
  %7 = vst [vmem:[%s6] sm:$0xff] %v4

// kernel: tile.11
$region0: #{tile.11}
  %s0 = inlined_call_operand.vmem [shape: f32[16,8], index: 0, kind: input, shape index: {}]
  %s1 = inlined_call_operand.vmem [shape: f32[1,128], index: 1, kind: output, shape index: {}]
  $region1: #{tile.11} parent=0
    #allocation0 [shape = 'u8[4096]{0}', space=vmem, size = 0x1000, scoped, tag = 'scoped mem for output reshape']
    %v2 = vld [vmem:[%s0] sm:$0x1]
    %vm3 = vcmask 64512
    %4 = vst.msk [vmem:[#allocation0] sm:$0x1] %vm3, %v2
    %s5 = scalar_lea.vmem %s0, 15
    %v6 = vld [vmem:[%s5] sm:$0x1]
    %7 = vrot.lane.b32.xlu0 %v6, 120
    %v8 = vpop.permute.xlu0 %7
    %vm9 = vcmask 1048512
    %10 = vst.msk [vmem:[#allocation0] sm:$0x1] %vm9, %v8
    %s11 = scalar_lea.vmem %s0, 14
    %v12 = vld [vmem:[%s11] sm:$0x1]
    %13 = vrot.lane.b32.xlu0 %v12, 112
    %v14 = vpop.permute.xlu0 %13
    %vm15 = vcmask 982912
    %16 = vst.msk [vmem:[#allocation0] sm:$0x1] %vm15, %v14
    %s17 = scalar_lea.vmem %s0, 13
    %v18 = vld [vmem:[%s17] sm:$0x1]
    %19 = vrot.lane.b32.xlu0 %v18, 104
    %v20 = vpop.permute.xlu0 %19
    %vm21 = vcmask 917312
    %22 = vst.msk [vmem:[#allocation0] sm:$0x1] %vm21, %v20
    %s23 = scalar_lea.vmem %s0, 12
    %v24 = vld [vmem:[%s23] sm:$0x1]
    %25 = vrot.lane.b32.xlu0 %v24, 96
    %v26 = vpop.permute.xlu0 %25
    %vm27 = vcmask 851712
    %28 = vst.msk [vmem:[#allocation0] sm:$0x1] %vm27, %v26
    %s29 = scalar_lea.vmem %s0, 11
    %v30 = vld [vmem:[%s29] sm:$0x1]
    %31 = vrot.lane.b32.xlu0 %v30, 88
    %v32 = vpop.permute.xlu0 %31
    %vm33 = vcmask 786112
    %34 = vst.msk [vmem:[#allocation0] sm:$0x1] %vm33, %v32
    %s35 = scalar_lea.vmem %s0, 10
    %v36 = vld [vmem:[%s35] sm:$0x1]
    %37 = vrot.lane.b32.xlu0 %v36, 80
    %v38 = vpop.permute.xlu0 %37
    %vm39 = vcmask 720512
    %40 = vst.msk [vmem:[#allocation0] sm:$0x1] %vm39, %v38
    %s41 = scalar_lea.vmem %s0, 9
    %v42 = vld [vmem:[%s41] sm:$0x1]
    %43 = vrot.lane.b32.xlu0 %v42, 72
    %v44 = vpop.permute.xlu0 %43
    %vm45 = vcmask 654912
    %46 = vst.msk [vmem:[#allocation0] sm:$0x1] %vm45, %v44
    %s47 = scalar_lea.vmem %s0, 8
    %v48 = vld [vmem:[%s47] sm:$0x1]
    %49 = vrot.lane.b32.xlu0 %v48, 64
    %v50 = vpop.permute.xlu0 %49
    %vm51 = vcmask 589312
    %52 = vst.msk [vmem:[#allocation0] sm:$0x1] %vm51, %v50
    %s53 = scalar_lea.vmem %s0, 7
    %v54 = vld [vmem:[%s53] sm:$0x1]
    %55 = vrot.lane.b32.xlu0 %v54, 56
    %v56 = vpop.permute.xlu0 %55
    %vm57 = vcmask 523712
    %58 = vst.msk [vmem:[#allocation0] sm:$0x1] %vm57, %v56
    %s59 = scalar_lea.vmem %s0, 6
    %v60 = vld [vmem:[%s59] sm:$0x1]
    %61 = vrot.lane.b32.xlu0 %v60, 48
    %v62 = vpop.permute.xlu0 %61
    %vm63 = vcmask 458112
    %64 = vst.msk [vmem:[#allocation0] sm:$0x1] %vm63, %v62
    %s65 = scalar_lea.vmem %s0, 5
    %v66 = vld [vmem:[%s65] sm:$0x1]
    %67 = vrot.lane.b32.xlu0 %v66, 40
    %v68 = vpop.permute.xlu0 %67
    %vm69 = vcmask 392512
    %70 = vst.msk [vmem:[#allocation0] sm:$0x1] %vm69, %v68
    %s71 = scalar_lea.vmem %s0, 4
    %v72 = vld [vmem:[%s71] sm:$0x1]
    %73 = vrot.lane.b32.xlu0 %v72, 32
    %v74 = vpop.permute.xlu0 %73
    %vm75 = vcmask 326912
    %76 = vst.msk [vmem:[#allocation0] sm:$0x1] %vm75, %v74
    %s77 = scalar_lea.vmem %s0, 3
    %v78 = vld [vmem:[%s77] sm:$0x1]
    %79 = vrot.lane.b32.xlu0 %v78, 24
    %v80 = vpop.permute.xlu0 %79
    %vm81 = vcmask 261312
    %82 = vst.msk [vmem:[#allocation0] sm:$0x1] %vm81, %v80
    %s83 = scalar_lea.vmem %s0, 2
    %v84 = vld [vmem:[%s83] sm:$0x1]
    %85 = vrot.lane.b32.xlu0 %v84, 16
    %v86 = vpop.permute.xlu0 %85
    %vm87 = vcmask 195712
    %88 = vst.msk [vmem:[#allocation0] sm:$0x1] %vm87, %v86
    %s89 = scalar_lea.vmem %s0, 1
    %v90 = vld [vmem:[%s89] sm:$0x1]
    %91 = vrot.lane.b32.xlu0 %v90, 8
    %v92 = vpop.permute.xlu0 %91
    %vm93 = vcmask 130112
    %94 = vst.msk [vmem:[#allocation0] sm:$0x1] %vm93, %v92
    %s96 = sshll.u32 1, 1
    %s97 = ssub.s32 %s96, 1
    %v99 = vld [vmem:[#allocation0] sm:%s97]
    %s100 = sshll.u32 1, 1
    %s101 = ssub.s32 %s100, 1
    %102 = vst [vmem:[%s1] sm:%s101] %v99

// kernel: double_conv.3
$region0: #{double_conv.3}
  #allocation0 [shape = 'u32[]', space=smem, size = 0x4, offset = 0x4, fixed_abs, tag = 'smem constant byte address 0x4 - core index']
  #allocation1 [shape = 'u32[144,128]{1,0:T(1,128)}', space=vmem, size = 0x12000, scoped, tag = 'internal scratch']
  #allocation2 [shape = 'f32[2,8]{1,0:T(2,128)}', space=vmem, size = 0x400, scoped, tag = 'scratch operand']
  %s0 = inlined_call_operand.vmem [shape: f32[512,12], index: 0, kind: input, shape index: {}]
  %s1 = inlined_call_operand.vmem [shape: f32[12,8], index: 1, kind: input, shape index: {}]
  %s2 = inlined_call_operand.vmem [shape: f32[512,8], index: 2, kind: output, shape index: {0}]
  %s3 = inlined_call_operand.vmem [shape: f32[2,8], index: 3, kind: output, shape index: {1}]
  %4 = xla_tuple %s2, %s3
  %s5 = sld [smem:[#allocation0]]
  $region57: #{double_conv.3} parent=0
    _
  %s7 = ssub.s32 1, %s5
  %s8 = scalar_select 0, %s7, %s5
  loop: start=0, step=1, limit=6
  $region2: #{double_conv.3} parent=0 // loop_pre_header
    _
  $region3: #{double_conv.3} parent=0 // loop_header
    %s10 = sphi 0, %s14
    %p11 = scmp.ge.s32.totalorder %s10, 6
    %s20 = sphi 0, %s22
    %s23 = sphi 0, %s20
    %s24 = sphi 0, %s23
    %s40 = sphi 0, %s24
    %s44 = sphi 0, %s44
    %s46 = sphi 0, %s44
    %s47 = sphi 0, %s46
    %s61 = sphi 0, %s47
    %s67 = sphi 0, %s69
    %s70 = sphi 0, %s67
    %s71 = sphi 0, %s70
    %s87 = sphi 0, %s71
    %s91 = sphi 0, %s91
    %s93 = sphi 0, %s91
    %s94 = sphi 0, %s93
    %s108 = sphi 0, %s94
  $region4: #{double_conv.3} parent=0 // loop_header_branch
    %13 = sbr.rel (%p11) target = $region8
  $region5: #{double_conv.3} parent=0 // loop_body
    %s15 = ssub.s32 %s10, 1
    %s16 = ssub.s32 %s10, 2
    %s17 = sadd.s32 %s10, 1
    %s18 = ssub.s32 %s10, %s17
    %p19 = scmp.eq.s32.totalorder %s18, 0
    %s21 = sadd.s32 %s20, 1
    %s22 = scalar_select %p19, %s20, %s21
    %p25 = pneg %p19
    %p26 = scmp.eq.s32.totalorder %s10, 3
    %p27 = por %p25, %p26
    %p28 = scmp.ne.s32.totalorder %s20, %s23
    %p29 = scmp.eq.s32.totalorder %s10, 0
    %p30 = por %p28, %p29
    %p31 = scmp.ne.s32.totalorder %s20, %s23
    %p32 = scmp.eq.s32.totalorder %s15, 3
    %p33 = por %p31, %p32
    %p34 = scmp.ne.s32.totalorder %s23, %s24
    %p35 = scmp.eq.s32.totalorder %s15, 0
    %p36 = por %p34, %p35
    %p37 = scmp.ne.s32.totalorder %s23, %s24
    %p38 = scmp.eq.s32.totalorder %s16, 3
    %p39 = por %p37, %p38
    %p41 = scmp.ne.s32.totalorder %s24, %s40
    %p42 = scmp.eq.s32.totalorder %s16, 0
    %p43 = por %p41, %p42
    %s45 = sadd.s32 %s44, 1
    %p48 = scmp.eq.s32.totalorder %s10, 3
    %p49 = scmp.ne.s32.totalorder %s44, %s46
    %p50 = scmp.eq.s32.totalorder %s10, 0
    %p51 = por %p49, %p50
    %p52 = scmp.ne.s32.totalorder %s44, %s46
    %p53 = scmp.eq.s32.totalorder %s15, 3
    %p54 = por %p52, %p53
    %p55 = scmp.ne.s32.totalorder %s46, %s47
    %p56 = scmp.eq.s32.totalorder %s15, 0
    %p57 = por %p55, %p56
    %p58 = scmp.ne.s32.totalorder %s46, %s47
    %p59 = scmp.eq.s32.totalorder %s16, 3
    %p60 = por %p58, %p59
    %p62 = scmp.ne.s32.totalorder %s47, %s61
    %p63 = scmp.eq.s32.totalorder %s16, 0
    %p64 = por %p62, %p63
    %s65 = ssub.s32 %s10, %s17
    %p66 = scmp.eq.s32.totalorder %s65, 0
    %s68 = sadd.s32 %s67, 1
    %s69 = scalar_select %p66, %s67, %s68
    %p72 = pneg %p66
    %p73 = scmp.eq.s32.totalorder %s10, 3
    %p74 = por %p72, %p73
    %p75 = scmp.ne.s32.totalorder %s67, %s70
    %p76 = scmp.eq.s32.totalorder %s10, 0
    %p77 = por %p75, %p76
    %p78 = scmp.ne.s32.totalorder %s67, %s70
    %p79 = scmp.eq.s32.totalorder %s15, 3
    %p80 = por %p78, %p79
    %p81 = scmp.ne.s32.totalorder %s70, %s71
    %p82 = scmp.eq.s32.totalorder %s15, 0
    %p83 = por %p81, %p82
    %p84 = scmp.ne.s32.totalorder %s70, %s71
    %p85 = scmp.eq.s32.totalorder %s16, 3
    %p86 = por %p84, %p85
    %p88 = scmp.ne.s32.totalorder %s71, %s87
    %p89 = scmp.eq.s32.totalorder %s16, 0
    %p90 = por %p88, %p89
    %s92 = sadd.s32 %s91, 1
    %p95 = scmp.eq.s32.totalorder %s10, 3
    %p96 = scmp.ne.s32.totalorder %s91, %s93
    %p97 = scmp.eq.s32.totalorder %s10, 0
    %p98 = por %p96, %p97
    %p99 = scmp.ne.s32.totalorder %s91, %s93
    %p100 = scmp.eq.s32.totalorder %s15, 3
    %p101 = por %p99, %p100
    %p102 = scmp.ne.s32.totalorder %s93, %s94
    %p103 = scmp.eq.s32.totalorder %s15, 0
    %p104 = por %p102, %p103
    %p105 = scmp.ne.s32.totalorder %s93, %s94
    %p106 = scmp.eq.s32.totalorder %s16, 3
    %p107 = por %p105, %p106
    %p109 = scmp.ne.s32.totalorder %s94, %s108
    %p110 = scmp.eq.s32.totalorder %s16, 0
    %p111 = por %p109, %p110
    %p112 = scmp.le.s32.totalorder 1, %s10
    %p113 = scmp.lt.s32.totalorder %s10, 5
    %p114 = pnand %p112, %p113
    %p115 = pneg %p114
    // Predicated region
    $region9: #{double_conv.3} parent=5 // pred_check
      _
    $region10: #{double_conv.3} parent=5 // pred_check_branch
      %117 = sbr.rel (%p114) target = $region12
    $region11: #{double_conv.3} parent=5 // pred_region
      %s118 = ssub.s32 %s10, 1
      // Predicated region
      $region13: #{double_conv.3} parent=11 // pred_check
        %p119 = pneg %p57
      $region14: #{double_conv.3} parent=11 // pred_check_branch
        %121 = sbr.rel (%p119) target = $region16
      $region15: #{double_conv.3} parent=11 // pred_region
        _
      $region16: #{double_conv.3} parent=11 // pred_fallthru
        _
    $region12: #{double_conv.3} parent=5 // pred_fallthru
      _
    %p122 = scmp.lt.s32.totalorder %s10, 4
    // Predicated region
    $region17: #{double_conv.3} parent=5 // pred_check
      %p123 = pneg %p122
    $region18: #{double_conv.3} parent=5 // pred_check_branch
      %125 = sbr.rel (%p123) target = $region20
    $region19: #{double_conv.3} parent=5 // pred_region
      // Predicated region
      $region21: #{double_conv.3} parent=19 // pred_check
        %p126 = pneg %p30
      $region22: #{double_conv.3} parent=19 // pred_check_branch
        %128 = sbr.rel (%p126) target = $region24
      $region23: #{double_conv.3} parent=19 // pred_region
        %s129 = smul.u32 16, %s10
        %p130 = scmp.lt.s32.totalorder %s129, 63
        %s131 = scalar_select %p130, %s129, 63
        %s132 = smul.addr %s131, 8
        %s133 = scalar_lea.vmem %s0, %s132
        %s134 = smul.u32 16, %s10
      $region24: #{double_conv.3} parent=19 // pred_fallthru
        _
    $region20: #{double_conv.3} parent=5 // pred_fallthru
      _
    %p135 = scmp.le.s32.totalorder 1, %s10
    %p136 = scmp.lt.s32.totalorder %s10, 5
    %p137 = pnand %p135, %p136
    %p138 = pneg %p137
    // Predicated region
    $region25: #{double_conv.3} parent=5 // pred_check
      _
    $region26: #{double_conv.3} parent=5 // pred_check_branch
      %140 = sbr.rel (%p137) target = $region28
    $region27: #{double_conv.3} parent=5 // pred_region
      %s141 = ssub.s32 %s10, 1
      %s142 = smul.u32 16, %s15
      %p143 = scmp.lt.s32.totalorder %s142, 63
      %s144 = scalar_select %p143, %s142, 63
      %s145 = smul.addr %s144, 8
      %s146 = scalar_lea.vmem %s0, %s145
      %p147 = pneg %p36
      %p148 = pneg %p33
      %p149 = pneg %p57
      %p150 = pneg %p54
      %p151 = pneg %p83
      %p152 = pneg %p80
      %s153 = smul.u32 16, %s15
      %p154 = scmp.lt.s32.totalorder %s153, 63
      %s155 = scalar_select %p154, %s153, 63
      %s156 = smul.addr %s155, 8
      %s157 = scalar_lea.vmem %s2, %s156
      %p158 = pneg %p104
      %p159 = pneg %p101
      %s160 = smul.u32 16, %s15
      %p161 = scmp.lt.s32.totalorder %s160, 63
      %s162 = scalar_select %p161, %s160, 63
      %s163 = smul.addr %s162, 8
      %s164 = scalar_lea.vmem %s0, %s163
      %s165 = smul.u32 16, %s15
      %s166 = smul.u32 16, %s15
      %p167 = scmp.lt.s32.totalorder %s166, 63
      %s168 = scalar_select %p167, %s166, 63
      %s169 = smul.addr %s168, 8
      %s170 = scalar_lea.vmem %s2, %s169
      %s171 = smul.u32 16, %s15
      %p172 = scmp.eq.s32.totalorder %s15, 0
      // Predicated region
      $region29: #{double_conv.3} parent=27 // pred_check
        %p173 = pneg %p172
      $region30: #{double_conv.3} parent=27 // pred_check_branch
        %175 = sbr.rel (%p173) target = $region32
      $region31: #{double_conv.3} parent=27 // pred_region
        %vm176 = vcmask 58368
        %177 = vst.msk [vmem:[#allocation2] sm:$0x3] %vm176, 0.0
      $region32: #{double_conv.3} parent=27 // pred_fallthru
        _
      %v178 = vld [vmem:[%s164] sm:$0xff]
      %v179 = vld [vmem:[%s164 + $0x8] sm:$0xff]
      %v180 = vld [vmem:[%s164 + $0x10] sm:$0xff]
      %v181 = vld [vmem:[%s164 + $0x18] sm:$0xff]
      %v182 = vld [vmem:[%s164 + $0x20] sm:$0xff]
      %v183 = vld [vmem:[%s164 + $0x28] sm:$0xff]
      %v184 = vld [vmem:[%s164 + $0x30] sm:$0xff]
      %v185 = vld [vmem:[%s164 + $0x38] sm:$0xff]
      %v186 = vld [vmem:[%s164 + $0x40] sm:$0xff]
      %v187 = vld [vmem:[%s164 + $0x48] sm:$0xff]
      %v188 = vld [vmem:[%s164 + $0x50] sm:$0xff]
      %v189 = vld [vmem:[%s164 + $0x58] sm:$0xff]
      %v190 = vld [vmem:[%s164 + $0x60] sm:$0xff]
      %v191 = vld [vmem:[%s164 + $0x68] sm:$0xff]
      %v192 = vld [vmem:[%s164 + $0x70] sm:$0xff]
      %v193 = vld [vmem:[%s164 + $0x78] sm:$0xff]
      %v194 = vld [vmem:[%s1] sm:$0xff]
      %v195 = vld [vmem:[%s1 + $0x8] sm:$0xf]
      %vm196 = vcmask 97280
      %v198 = vsel %vm196, %v178, 0
      %v201 = vsel %vm196, %v179, 0
      %v204 = vsel %vm196, %v180, 0
      %v207 = vsel %vm196, %v181, 0
      %v210 = vsel %vm196, %v182, 0
      %v213 = vsel %vm196, %v183, 0
      %v216 = vsel %vm196, %v184, 0
      %v219 = vsel %vm196, %v185, 0
      %v222 = vsel %vm196, %v186, 0
      %v225 = vsel %vm196, %v187, 0
      %v228 = vsel %vm196, %v188, 0
      %v231 = vsel %vm196, %v189, 0
      %v234 = vsel %vm196, %v190, 0
      %v237 = vsel %vm196, %v191, 0
      %v240 = vsel %vm196, %v192, 0
      %v243 = vsel %vm196, %v193, 0
      %vm245 = vcmask 1043456
      %v247 = vsel %vm245, %v195, 0
      %249 = vmatprep.subr.mxu0 0.0
      %250 = vmatpush1.msra.mxu0 0.0
      %251 = vmatprep.subr.mxu0 0.0
      %252 = vmatpush1.msra.mxu0 0.0
      %253 = vmatprep.subr.mxu0 0.0
      %254 = vmatpush1.msra.mxu0 0.0
      %255 = vmatprep.subr.mxu0 0.0
      %256 = vmatpush1.msra.mxu0 0.0
      %257 = vmatprep.subr.mxu0 0.0
      %258 = vmatpush1.msra.mxu0 0.0
      %259 = vmatprep.subr.mxu0 0.0
      %260 = vmatpush1.msra.mxu0 0.0
      %261 = vmatprep.subr.mxu0 0.0
      %262 = vmatpush1.msra.mxu0 0.0
      %263 = vmatprep.subr.mxu0 0.0
      %264 = vmatpush1.msra.mxu0 0.0
      %265 = vmatprep.subr.mxu0 0.0
      %266 = vmatpush1.msra.mxu0 0.0
      %267 = vmatprep.subr.mxu0 0.0
      %268 = vmatpush1.msra.mxu0 0.0
      %269 = vmatprep.subr.mxu0 0.0
      %270 = vmatpush1.msra.mxu0 0.0
      %271 = vmatprep.subr.mxu0 0.0
      %272 = vmatpush1.msra.mxu0 0.0
      %273 = vmatprep.subr.mxu0 0.0
      %274 = vmatpush1.msra.mxu0 0.0
      %275 = vmatprep.subr.mxu0 0.0
      %276 = vmatpush1.msra.mxu0 0.0
      %277 = vmatprep.subr.mxu0 0.0
      %278 = vmatpush1.msra.mxu0 %v247
      %279 = vmatprep.subr.mxu0 0.0
      %280 = vmatpush1.msra.mxu0 %v194
      %281 = vmatprep.subr.mxu0 0.0
      %282 = vmatpush2.msra.mxu0 0.0
      %283 = vmatprep.subr.mxu0 0.0
      %284 = vmatpush2.msra.mxu0 0.0
      %285 = vmatprep.subr.mxu0 0.0
      %286 = vmatpush2.msra.mxu0 0.0
      %287 = vmatprep.subr.mxu0 0.0
      %288 = vmatpush2.msra.mxu0 0.0
      %289 = vmatprep.subr.mxu0 0.0
      %290 = vmatpush2.msra.mxu0 0.0
      %291 = vmatprep.subr.mxu0 0.0
      %292 = vmatpush2.msra.mxu0 0.0
      %293 = vmatprep.subr.mxu0 0.0
      %294 = vmatpush2.msra.mxu0 0.0
      %295 = vmatprep.subr.mxu0 0.0
      %296 = vmatpush2.msra.mxu0 0.0
      %297 = vmatprep.subr.mxu0 0.0
      %298 = vmatpush2.msra.mxu0 0.0
      %299 = vmatprep.subr.mxu0 0.0
      %300 = vmatpush2.msra.mxu0 0.0
      %301 = vmatprep.subr.mxu0 0.0
      %302 = vmatpush2.msra.mxu0 0.0
      %303 = vmatprep.subr.mxu0 0.0
      %304 = vmatpush2.msra.mxu0 0.0
      %305 = vmatprep.subr.mxu0 0.0
      %306 = vmatpush2.msra.mxu0 0.0
      %307 = vmatprep.subr.mxu0 0.0
      %308 = vmatpush2.msra.mxu0 0.0
      %309 = vmatprep.subr.mxu0 0.0
      %310 = vmatpush2.msra.mxu0 0.0
      %311 = vmatprep.subr.mxu0 0.0
      %312 = vmatpush2.msra.mxu0 0.0
      %313 = vmatprep.mubr.f32.mxu0 0.0
      %314 = vmatmul.mubr.f32.gmra.mxu0 %v198
      %v315 = vpop.f32.mrf.mxu0
      %v316 = vadd.f32 0.0, %v315
      %v317 = vpop.f32.mrf.mxu0
      %318 = vmatprep.mubr.f32.mxu0 0.0
      %319 = vmatmul.mubr.f32.gmra.mxu0 %v201
      %v320 = vpop.f32.mrf.mxu0
      %v321 = vadd.f32 0.0, %v320
      %v322 = vpop.f32.mrf.mxu0
      %323 = vmatprep.mubr.f32.mxu0 0.0
      %324 = vmatmul.mubr.f32.gmra.mxu0 %v204
      %v325 = vpop.f32.mrf.mxu0
      %v326 = vadd.f32 0.0, %v325
      %v327 = vpop.f32.mrf.mxu0
      %328 = vmatprep.mubr.f32.mxu0 0.0
      %329 = vmatmul.mubr.f32.gmra.mxu0 %v207
      %v330 = vpop.f32.mrf.mxu0
      %v331 = vadd.f32 0.0, %v330
      %v332 = vpop.f32.mrf.mxu0
      %333 = vmatprep.mubr.f32.mxu0 0.0
      %334 = vmatmul.mubr.f32.gmra.mxu0 %v210
      %v335 = vpop.f32.mrf.mxu0
      %v336 = vadd.f32 0.0, %v335
      %v337 = vpop.f32.mrf.mxu0
      %338 = vmatprep.mubr.f32.mxu0 0.0
      %339 = vmatmul.mubr.f32.gmra.mxu0 %v213
      %v340 = vpop.f32.mrf.mxu0
      %v341 = vadd.f32 0.0, %v340
      %v342 = vpop.f32.mrf.mxu0
      %343 = vmatprep.mubr.f32.mxu0 0.0
      %344 = vmatmul.mubr.f32.gmra.mxu0 %v216
      %v345 = vpop.f32.mrf.mxu0
      %v346 = vadd.f32 0.0, %v345
      %v347 = vpop.f32.mrf.mxu0
      %348 = vmatprep.mubr.f32.mxu0 0.0
      %349 = vmatmul.mubr.f32.gmra.mxu0 %v219
      %v350 = vpop.f32.mrf.mxu0
      %v351 = vadd.f32 0.0, %v350
      %v352 = vpop.f32.mrf.mxu0
      %353 = vmatprep.mubr.f32.mxu0 0.0
      %354 = vmatmul.mubr.f32.gmra.mxu0 %v222
      %v355 = vpop.f32.mrf.mxu0
      %v356 = vadd.f32 0.0, %v355
      %v357 = vpop.f32.mrf.mxu0
      %358 = vmatprep.mubr.f32.mxu0 0.0
      %359 = vmatmul.mubr.f32.gmra.mxu0 %v225
      %v360 = vpop.f32.mrf.mxu0
      %v361 = vadd.f32 0.0, %v360
      %v362 = vpop.f32.mrf.mxu0
      %363 = vmatprep.mubr.f32.mxu0 0.0
      %364 = vmatmul.mubr.f32.gmra.mxu0 %v228
      %v365 = vpop.f32.mrf.mxu0
      %v366 = vadd.f32 0.0, %v365
      %v367 = vpop.f32.mrf.mxu0
      %368 = vmatprep.mubr.f32.mxu0 0.0
      %369 = vmatmul.mubr.f32.gmra.mxu0 %v231
      %v370 = vpop.f32.mrf.mxu0
      %v371 = vadd.f32 0.0, %v370
      %v372 = vpop.f32.mrf.mxu0
      %373 = vmatprep.mubr.f32.mxu0 0.0
      %374 = vmatmul.mubr.f32.gmra.mxu0 %v234
      %v375 = vpop.f32.mrf.mxu0
      %v376 = vadd.f32 0.0, %v375
      %v377 = vpop.f32.mrf.mxu0
      %378 = vmatprep.mubr.f32.mxu0 0.0
      %379 = vmatmul.mubr.f32.gmra.mxu0 %v237
      %v380 = vpop.f32.mrf.mxu0
      %v381 = vadd.f32 0.0, %v380
      %v382 = vpop.f32.mrf.mxu0
      %383 = vmatprep.mubr.f32.mxu0 0.0
      %384 = vmatmul.mubr.f32.gmra.mxu0 %v240
      %v385 = vpop.f32.mrf.mxu0
      %v386 = vadd.f32 0.0, %v385
      %v387 = vpop.f32.mrf.mxu0
      %388 = vmatprep.mubr.f32.mxu0 0.0
      %389 = vmatmul.mubr.f32.gmra.mxu0 %v243
      %v390 = vpop.f32.mrf.mxu0
      %v391 = vadd.f32 0.0, %v390
      %v392 = vpop.f32.mrf.mxu0
      %393 = vdwg.mxu0
      %vm394 = vcmask 64512
      %395 = vst.msk [vmem:[%s170] sm:$0xff] %vm394, %v316
      %396 = vst.msk [vmem:[%s170 + $0x8] sm:$0xff] %vm394, %v321
      %397 = vst.msk [vmem:[%s170 + $0x10] sm:$0xff] %vm394, %v326
      %398 = vst.msk [vmem:[%s170 + $0x18] sm:$0xff] %vm394, %v331
      %399 = vst.msk [vmem:[%s170 + $0x20] sm:$0xff] %vm394, %v336
      %400 = vst.msk [vmem:[%s170 + $0x28] sm:$0xff] %vm394, %v341
      %401 = vst.msk [vmem:[%s170 + $0x30] sm:$0xff] %vm394, %v346
      %402 = vst.msk [vmem:[%s170 + $0x38] sm:$0xff] %vm394, %v351
      %403 = vst.msk [vmem:[%s170 + $0x40] sm:$0xff] %vm394, %v356
      %404 = vst.msk [vmem:[%s170 + $0x48] sm:$0xff] %vm394, %v361
      %405 = vst.msk [vmem:[%s170 + $0x50] sm:$0xff] %vm394, %v366
      %406 = vst.msk [vmem:[%s170 + $0x58] sm:$0xff] %vm394, %v371
      %407 = vst.msk [vmem:[%s170 + $0x60] sm:$0xff] %vm394, %v376
      %408 = vst.msk [vmem:[%s170 + $0x68] sm:$0xff] %vm394, %v381
      %409 = vst.msk [vmem:[%s170 + $0x70] sm:$0xff] %vm394, %v386
      %410 = vst.msk [vmem:[%s170 + $0x78] sm:$0xff] %vm394, %v391
      %v411 = vsel %vm394, %v316, 0.0
      %v412 = vsel %vm394, %v321, 0.0
      %v413 = vadd.f32 %v411, %v412
      %v414 = vsel %vm394, %v326, 0.0
      %v415 = vadd.f32 %v413, %v414
      %v416 = vsel %vm394, %v331, 0.0
      %v417 = vadd.f32 %v415, %v416
      %v418 = vsel %vm394, %v336, 0.0
      %v419 = vadd.f32 %v417, %v418
      %v420 = vsel %vm394, %v341, 0.0
      %v421 = vadd.f32 %v419, %v420
      %v422 = vsel %vm394, %v346, 0.0
      %v423 = vadd.f32 %v421, %v422
      %v424 = vsel %vm394, %v351, 0.0
      %v425 = vadd.f32 %v423, %v424
      %v426 = vsel %vm394, %v356, 0.0
      %v427 = vadd.f32 %v425, %v426
      %v428 = vsel %vm394, %v361, 0.0
      %v429 = vadd.f32 %v427, %v428
      %v430 = vsel %vm394, %v366, 0.0
      %v431 = vadd.f32 %v429, %v430
      %v432 = vsel %vm394, %v371, 0.0
      %v433 = vadd.f32 %v431, %v432
      %v434 = vsel %vm394, %v376, 0.0
      %v435 = vadd.f32 %v433, %v434
      %v436 = vsel %vm394, %v381, 0.0
      %v437 = vadd.f32 %v435, %v436
      %v438 = vsel %vm394, %v386, 0.0
      %v439 = vadd.f32 %v437, %v438
      %v440 = vsel %vm394, %v391, 0.0
      %v441 = vadd.f32 %v439, %v440
      %v442 = vrot.slane %v441, 4
      %v443 = vadd.f32 %v441, %v442
      %v444 = vrot.slane %v443, 2
      %v445 = vadd.f32 %v443, %v444
      %v446 = vrot.slane %v445, 1
      %v447 = vadd.f32 %v445, %v446
      %v448 = vmul.f32 %v316, %v316
      %v449 = vmul.f32 %v321, %v321
      %v450 = vmul.f32 %v326, %v326
      %v451 = vmul.f32 %v331, %v331
      %v452 = vmul.f32 %v336, %v336
      %v453 = vmul.f32 %v341, %v341
      %v454 = vmul.f32 %v346, %v346
      %v455 = vmul.f32 %v351, %v351
      %v456 = vmul.f32 %v356, %v356
      %v457 = vmul.f32 %v361, %v361
      %v458 = vmul.f32 %v366, %v366
      %v459 = vmul.f32 %v371, %v371
      %v460 = vmul.f32 %v376, %v376
      %v461 = vmul.f32 %v381, %v381
      %v462 = vmul.f32 %v386, %v386
      %v463 = vmul.f32 %v391, %v391
      %v464 = vsel %vm394, %v448, 0.0
      %v465 = vsel %vm394, %v449, 0.0
      %v466 = vadd.f32 %v464, %v465
      %v467 = vsel %vm394, %v450, 0.0
      %v468 = vadd.f32 %v466, %v467
      %v469 = vsel %vm394, %v451, 0.0
      %v470 = vadd.f32 %v468, %v469
      %v471 = vsel %vm394, %v452, 0.0
      %v472 = vadd.f32 %v470, %v471
      %v473 = vsel %vm394, %v453, 0.0
      %v474 = vadd.f32 %v472, %v473
      %v475 = vsel %vm394, %v454, 0.0
      %v476 = vadd.f32 %v474, %v475
      %v477 = vsel %vm394, %v455, 0.0
      %v478 = vadd.f32 %v476, %v477
      %v479 = vsel %vm394, %v456, 0.0
      %v480 = vadd.f32 %v478, %v479
      %v481 = vsel %vm394, %v457, 0.0
      %v482 = vadd.f32 %v480, %v481
      %v483 = vsel %vm394, %v458, 0.0
      %v484 = vadd.f32 %v482, %v483
      %v485 = vsel %vm394, %v459, 0.0
      %v486 = vadd.f32 %v484, %v485
      %v487 = vsel %vm394, %v460, 0.0
      %v488 = vadd.f32 %v486, %v487
      %v489 = vsel %vm394, %v461, 0.0
      %v490 = vadd.f32 %v488, %v489
      %v491 = vsel %vm394, %v462, 0.0
      %v492 = vadd.f32 %v490, %v491
      %v493 = vsel %vm394, %v463, 0.0
      %v494 = vadd.f32 %v492, %v493
      %v495 = vrot.slane %v494, 4
      %v496 = vadd.f32 %v494, %v495
      %v497 = vrot.slane %v496, 2
      %v498 = vadd.f32 %v496, %v497
      %v499 = vrot.slane %v498, 1
      %v500 = vadd.f32 %v498, %v499
      %v501 = vld [vmem:[#allocation2] sm:$0x3]
      %vm502 = vcmask 1040384
      %v503 = vsel %vm502, %v447, %v500
      %v504 = vadd.f32 %v501, %v503
      %vm505 = vcmask 58368
      %506 = vst.msk [vmem:[#allocation2] sm:$0x3] %vm505, %v504
      %p507 = scmp.eq.s32.totalorder %s15, 3
      // Predicated region
      $region33: #{double_conv.3} parent=27 // pred_check
        %p508 = pneg %p507
      $region34: #{double_conv.3} parent=27 // pred_check_branch
        %510 = sbr.rel (%p508) target = $region36
      $region35: #{double_conv.3} parent=27 // pred_region
        %v511 = vld [vmem:[#allocation2] sm:$0x3]
        %512 = vst.msk [vmem:[%s3] sm:$0x3] %vm505, %v511
      $region36: #{double_conv.3} parent=27 // pred_fallthru
        _
      %s513 = smul.u32 16, %s15
      %p514 = scmp.lt.s32.totalorder %s513, 63
      %s515 = scalar_select %p514, %s513, 63
      %s516 = smul.addr %s515, 8
      %s517 = scalar_lea.vmem %s2, %s516
      // Predicated region
      $region37: #{double_conv.3} parent=27 // pred_check
        %p518 = pneg %p80
      $region38: #{double_conv.3} parent=27 // pred_check_branch
        %520 = sbr.rel (%p518) target = $region40
      $region39: #{double_conv.3} parent=27 // pred_region
        %s521 = smul.u32 16, %s15
      $region40: #{double_conv.3} parent=27 // pred_fallthru
        _
      // Predicated region
      $region41: #{double_conv.3} parent=27 // pred_check
        %p522 = pneg %p101
      $region42: #{double_conv.3} parent=27 // pred_check_branch
        %524 = sbr.rel (%p522) target = $region44
      $region43: #{double_conv.3} parent=27 // pred_region
        _
      $region44: #{double_conv.3} parent=27 // pred_fallthru
        _
      // Predicated region
      $region45: #{double_conv.3} parent=27 // pred_check
        %p525 = pneg %p101
      $region46: #{double_conv.3} parent=27 // pred_check_branch
        %527 = sbr.rel (%p525) target = $region48
      $region47: #{double_conv.3} parent=27 // pred_region
        _
      $region48: #{double_conv.3} parent=27 // pred_fallthru
        _
    $region28: #{double_conv.3} parent=5 // pred_fallthru
      _
    %p528 = scmp.le.s32.totalorder 2, %s10
    // Predicated region
    $region49: #{double_conv.3} parent=5 // pred_check
      %p529 = pneg %p528
    $region50: #{double_conv.3} parent=5 // pred_check_branch
      %531 = sbr.rel (%p529) target = $region52
    $region51: #{double_conv.3} parent=5 // pred_region
      %s532 = ssub.s32 %s10, 2
      // Predicated region
      $region53: #{double_conv.3} parent=51 // pred_check
        %p533 = pneg %p86
      $region54: #{double_conv.3} parent=51 // pred_check_branch
        %535 = sbr.rel (%p533) target = $region56
      $region55: #{double_conv.3} parent=51 // pred_region
        %s536 = smul.u32 16, %s16
        %p537 = scmp.lt.s32.totalorder %s536, 63
        %s538 = scalar_select %p537, %s536, 63
        %s539 = smul.addr %s538, 8
        %s540 = scalar_lea.vmem %s2, %s539
      $region56: #{double_conv.3} parent=51 // pred_fallthru
        _
    $region52: #{double_conv.3} parent=5 // pred_fallthru
      _
  $region6: #{double_conv.3} parent=0 // loop_footer
    %s14 = sadd.s32 1, %s10
  $region7: #{double_conv.3} parent=0 // loop_footer_branch
    %9 = sbr.rel target = $region3
  $region8: #{double_conv.3} parent=0 // loop_exit
    _

// kernel: double_conv.5
$region0: #{double_conv.5}
  #allocation0 [shape = 'u32[]', space=smem, size = 0x4, offset = 0x4, fixed_abs, tag = 'smem constant byte address 0x4 - core index']
  #allocation1 [shape = 'u32[144,128]{1,0:T(1,128)}', space=vmem, size = 0x12000, scoped, tag = 'internal scratch']
  %s0 = inlined_call_operand.vmem [shape: f32[32,128], index: 0, kind: input, shape index: {}]
  %s1 = inlined_call_operand.vmem [shape: f32[1,128], index: 1, kind: input, shape index: {}]
  %s2 = inlined_call_operand.vmem [shape: f32[1,128], index: 2, kind: input, shape index: {}]
  %s3 = inlined_call_operand.vmem [shape: f32[32,128], index: 3, kind: output, shape index: {}]
  %s4 = sld [smem:[#allocation0]]
  $region45: #{double_conv.5} parent=0
    _
  %s6 = ssub.s32 1, %s4
  %s7 = scalar_select 0, %s6, %s4
  loop: start=0, step=1, limit=6
  $region2: #{double_conv.5} parent=0 // loop_pre_header
    _
  $region3: #{double_conv.5} parent=0 // loop_header
    %s9 = sphi 0, %s13
    %p10 = scmp.ge.s32.totalorder %s9, 6
    %s19 = sphi 0, %s21
    %s22 = sphi 0, %s19
    %s23 = sphi 0, %s22
    %s39 = sphi 0, %s23
    %s43 = sphi 0, %s43
    %s45 = sphi 0, %s43
    %s46 = sphi 0, %s45
    %s60 = sphi 0, %s46
    %s64 = sphi 0, %s64
    %s66 = sphi 0, %s64
    %s67 = sphi 0, %s66
    %s81 = sphi 0, %s67
    %s87 = sphi 0, %s89
    %s90 = sphi 0, %s87
    %s91 = sphi 0, %s90
    %s107 = sphi 0, %s91
  $region4: #{double_conv.5} parent=0 // loop_header_branch
    %12 = sbr.rel (%p10) target = $region8
  $region5: #{double_conv.5} parent=0 // loop_body
    %s14 = ssub.s32 %s9, 1
    %s15 = ssub.s32 %s9, 2
    %s16 = sadd.s32 %s9, 1
    %s17 = ssub.s32 %s9, %s16
    %p18 = scmp.eq.s32.totalorder %s17, 0
    %s20 = sadd.s32 %s19, 1
    %s21 = scalar_select %p18, %s19, %s20
    %p24 = pneg %p18
    %p25 = scmp.eq.s32.totalorder %s9, 3
    %p26 = por %p24, %p25
    %p27 = scmp.ne.s32.totalorder %s19, %s22
    %p28 = scmp.eq.s32.totalorder %s9, 0
    %p29 = por %p27, %p28
    %p30 = scmp.ne.s32.totalorder %s19, %s22
    %p31 = scmp.eq.s32.totalorder %s14, 3
    %p32 = por %p30, %p31
    %p33 = scmp.ne.s32.totalorder %s22, %s23
    %p34 = scmp.eq.s32.totalorder %s14, 0
    %p35 = por %p33, %p34
    %p36 = scmp.ne.s32.totalorder %s22, %s23
    %p37 = scmp.eq.s32.totalorder %s15, 3
    %p38 = por %p36, %p37
    %p40 = scmp.ne.s32.totalorder %s23, %s39
    %p41 = scmp.eq.s32.totalorder %s15, 0
    %p42 = por %p40, %p41
    %s44 = sadd.s32 %s43, 1
    %p47 = scmp.eq.s32.totalorder %s9, 3
    %p48 = scmp.ne.s32.totalorder %s43, %s45
    %p49 = scmp.eq.s32.totalorder %s9, 0
    %p50 = por %p48, %p49
    %p51 = scmp.ne.s32.totalorder %s43, %s45
    %p52 = scmp.eq.s32.totalorder %s14, 3
    %p53 = por %p51, %p52
    %p54 = scmp.ne.s32.totalorder %s45, %s46
    %p55 = scmp.eq.s32.totalorder %s14, 0
    %p56 = por %p54, %p55
    %p57 = scmp.ne.s32.totalorder %s45, %s46
    %p58 = scmp.eq.s32.totalorder %s15, 3
    %p59 = por %p57, %p58
    %p61 = scmp.ne.s32.totalorder %s46, %s60
    %p62 = scmp.eq.s32.totalorder %s15, 0
    %p63 = por %p61, %p62
    %s65 = sadd.s32 %s64, 1
    %p68 = scmp.eq.s32.totalorder %s9, 3
    %p69 = scmp.ne.s32.totalorder %s64, %s66
    %p70 = scmp.eq.s32.totalorder %s9, 0
    %p71 = por %p69, %p70
    %p72 = scmp.ne.s32.totalorder %s64, %s66
    %p73 = scmp.eq.s32.totalorder %s14, 3
    %p74 = por %p72, %p73
    %p75 = scmp.ne.s32.totalorder %s66, %s67
    %p76 = scmp.eq.s32.totalorder %s14, 0
    %p77 = por %p75, %p76
    %p78 = scmp.ne.s32.totalorder %s66, %s67
    %p79 = scmp.eq.s32.totalorder %s15, 3
    %p80 = por %p78, %p79
    %p82 = scmp.ne.s32.totalorder %s67, %s81
    %p83 = scmp.eq.s32.totalorder %s15, 0
    %p84 = por %p82, %p83
    %s85 = ssub.s32 %s9, %s16
    %p86 = scmp.eq.s32.totalorder %s85, 0
    %s88 = sadd.s32 %s87, 1
    %s89 = scalar_select %p86, %s87, %s88
    %p92 = pneg %p86
    %p93 = scmp.eq.s32.totalorder %s9, 3
    %p94 = por %p92, %p93
    %p95 = scmp.ne.s32.totalorder %s87, %s90
    %p96 = scmp.eq.s32.totalorder %s9, 0
    %p97 = por %p95, %p96
    %p98 = scmp.ne.s32.totalorder %s87, %s90
    %p99 = scmp.eq.s32.totalorder %s14, 3
    %p100 = por %p98, %p99
    %p101 = scmp.ne.s32.totalorder %s90, %s91
    %p102 = scmp.eq.s32.totalorder %s14, 0
    %p103 = por %p101, %p102
    %p104 = scmp.ne.s32.totalorder %s90, %s91
    %p105 = scmp.eq.s32.totalorder %s15, 3
    %p106 = por %p104, %p105
    %p108 = scmp.ne.s32.totalorder %s91, %s107
    %p109 = scmp.eq.s32.totalorder %s15, 0
    %p110 = por %p108, %p109
    %p111 = scmp.le.s32.totalorder 1, %s9
    %p112 = scmp.lt.s32.totalorder %s9, 5
    %p113 = pnand %p111, %p112
    %p114 = pneg %p113
    // Predicated region
    $region9: #{double_conv.5} parent=5 // pred_check
      _
    $region10: #{double_conv.5} parent=5 // pred_check_branch
      %116 = sbr.rel (%p113) target = $region12
    $region11: #{double_conv.5} parent=5 // pred_region
      %s117 = ssub.s32 %s9, 1
      // Predicated region
      $region13: #{double_conv.5} parent=11 // pred_check
        %p118 = pneg %p56
      $region14: #{double_conv.5} parent=11 // pred_check_branch
        %120 = sbr.rel (%p118) target = $region16
      $region15: #{double_conv.5} parent=11 // pred_region
        _
      $region16: #{double_conv.5} parent=11 // pred_fallthru
        _
      // Predicated region
      $region17: #{double_conv.5} parent=11 // pred_check
        %p121 = pneg %p77
      $region18: #{double_conv.5} parent=11 // pred_check_branch
        %123 = sbr.rel (%p121) target = $region20
      $region19: #{double_conv.5} parent=11 // pred_region
        _
      $region20: #{double_conv.5} parent=11 // pred_fallthru
        _
    $region12: #{double_conv.5} parent=5 // pred_fallthru
      _
    %p124 = scmp.lt.s32.totalorder %s9, 4
    // Predicated region
    $region21: #{double_conv.5} parent=5 // pred_check
      %p125 = pneg %p124
    $region22: #{double_conv.5} parent=5 // pred_check_branch
      %127 = sbr.rel (%p125) target = $region24
    $region23: #{double_conv.5} parent=5 // pred_region
      // Predicated region
      $region25: #{double_conv.5} parent=23 // pred_check
        %p128 = pneg %p29
      $region26: #{double_conv.5} parent=23 // pred_check_branch
        %130 = sbr.rel (%p128) target = $region28
      $region27: #{double_conv.5} parent=23 // pred_region
        %p131 = scmp.lt.s32.totalorder %s9, 3
        %s132 = scalar_select %p131, %s9, 3
        %s133 = smul.addr %s132, 8
        %s134 = scalar_lea.vmem %s0, %s133
      $region28: #{double_conv.5} parent=23 // pred_fallthru
        _
    $region24: #{double_conv.5} parent=5 // pred_fallthru
      _
    %p135 = scmp.le.s32.totalorder 1, %s9
    %p136 = scmp.lt.s32.totalorder %s9, 5
    %p137 = pnand %p135, %p136
    %p138 = pneg %p137
    // Predicated region
    $region29: #{double_conv.5} parent=5 // pred_check
      _
    $region30: #{double_conv.5} parent=5 // pred_check_branch
      %140 = sbr.rel (%p137) target = $region32
    $region31: #{double_conv.5} parent=5 // pred_region
      %s141 = ssub.s32 %s9, 1
      %p142 = scmp.lt.s32.totalorder %s14, 3
      %s143 = scalar_select %p142, %s14, 3
      %s144 = smul.addr %s143, 8
      %s145 = scalar_lea.vmem %s0, %s144
      %p146 = pneg %p35
      %p147 = pneg %p32
      %p148 = pneg %p56
      %p149 = pneg %p53
      %p150 = pneg %p77
      %p151 = pneg %p74
      %p152 = pneg %p103
      %p153 = pneg %p100
      %p154 = scmp.lt.s32.totalorder %s14, 3
      %s155 = scalar_select %p154, %s14, 3
      %s156 = smul.addr %s155, 8
      %s157 = scalar_lea.vmem %s3, %s156
      %p158 = scmp.lt.s32.totalorder %s14, 3
      %s159 = scalar_select %p158, %s14, 3
      %s160 = smul.addr %s159, 8
      %s161 = scalar_lea.vmem %s0, %s160
      %p162 = scmp.lt.s32.totalorder %s14, 3
      %s163 = scalar_select %p162, %s14, 3
      %s164 = smul.addr %s163, 8
      %s165 = scalar_lea.vmem %s3, %s164
      %v166 = vld [vmem:[%s161] sm:$0xff]
      %v167 = vld [vmem:[%s1] sm:$0x1]
      %v169 = vlaneseq
      %v170 = vshrl.u32 %v169, 7
      %v171 = vsub.s32 0, %v170
      %v172 = vrot.slane %v167, %v171
      %v174 = vmul.f32 %v166, %v172
      %v175 = vld [vmem:[%s2] sm:$0x1]
      %v177 = vlaneseq
      %v178 = vshrl.u32 %v177, 7
      %v179 = vsub.s32 0, %v178
      %v180 = vrot.slane %v175, %v179
      %v182 = vadd.f32 %v174, %v180
      %v183 = vmax.f32 %v182, 0.0
      %184 = vst [vmem:[%s165] sm:$0xff] %v183
      %p185 = scmp.lt.s32.totalorder %s14, 3
      %s186 = scalar_select %p185, %s14, 3
      %s187 = smul.addr %s186, 8
      %s188 = scalar_lea.vmem %s3, %s187
      // Predicated region
      $region33: #{double_conv.5} parent=31 // pred_check
        %p189 = pneg %p100
      $region34: #{double_conv.5} parent=31 // pred_check_branch
        %191 = sbr.rel (%p189) target = $region36
      $region35: #{double_conv.5} parent=31 // pred_region
        _
      $region36: #{double_conv.5} parent=31 // pred_fallthru
        _
    $region32: #{double_conv.5} parent=5 // pred_fallthru
      _
    %p192 = scmp.le.s32.totalorder 2, %s9
    // Predicated region
    $region37: #{double_conv.5} parent=5 // pred_check
      %p193 = pneg %p192
    $region38: #{double_conv.5} parent=5 // pred_check_branch
      %195 = sbr.rel (%p193) target = $region40
    $region39: #{double_conv.5} parent=5 // pred_region
      %s196 = ssub.s32 %s9, 2
      // Predicated region
      $region41: #{double_conv.5} parent=39 // pred_check
        %p197 = pneg %p106
      $region42: #{double_conv.5} parent=39 // pred_check_branch
        %199 = sbr.rel (%p197) target = $region44
      $region43: #{double_conv.5} parent=39 // pred_region
        %p200 = scmp.lt.s32.totalorder %s15, 3
        %s201 = scalar_select %p200, %s15, 3
        %s202 = smul.addr %s201, 8
        %s203 = scalar_lea.vmem %s3, %s202
      $region44: #{double_conv.5} parent=39 // pred_fallthru
        _
    $region40: #{double_conv.5} parent=5 // pred_fallthru
      _
  $region6: #{double_conv.5} parent=0 // loop_footer
    %s13 = sadd.s32 1, %s9
  $region7: #{double_conv.5} parent=0 // loop_footer_branch
    %8 = sbr.rel target = $region3
  $region8: #{double_conv.5} parent=0 // loop_exit
    _

// kernel: double_conv.4
$region0: #{double_conv.4}
  #allocation0 [shape = 'u32[]', space=smem, size = 0x4, offset = 0x4, fixed_abs, tag = 'smem constant byte address 0x4 - core index']
  #allocation1 [shape = 'u32[144,128]{1,0:T(1,128)}', space=vmem, size = 0x12000, scoped, tag = 'internal scratch']
  #allocation2 [shape = 'f32[2,8]{1,0:T(2,128)}', space=vmem, size = 0x400, scoped, tag = 'scratch operand']
  %s0 = inlined_call_operand.vmem [shape: f32[2,16,16,8], index: 0, kind: input, shape index: {}]
  %s1 = inlined_call_operand.vmem [shape: f32[1,8], index: 1, kind: input, shape index: {}]
  %s2 = inlined_call_operand.vmem [shape: f32[1,8], index: 2, kind: input, shape index: {}]
  %s3 = inlined_call_operand.vmem [shape: f32[72,8], index: 3, kind: input, shape index: {}]
  %s4 = inlined_call_operand.vmem [shape: f32[2,16,16,8], index: 4, kind: output, shape index: {0}]
  %s5 = inlined_call_operand.vmem [shape: f32[2,8], index: 5, kind: output, shape index: {1}]
  %6 = xla_tuple %s4, %s5
  %s7 = sld [smem:[#allocation0]]
  $region65: #{double_conv.4} parent=0
    _
  %s9 = ssub.s32 1, %s7
  %s10 = scalar_select 0, %s9, %s7
  loop: start=0, step=1, limit=4
  $region2: #{double_conv.4} parent=0 // loop_pre_header
    _
  $region3: #{double_conv.4} parent=0 // loop_header
    %s12 = sphi 0, %s16
    %p13 = scmp.ge.s32.totalorder %s12, 4
    %s22 = sphi 0, %s24
    %s25 = sphi 0, %s22
    %s26 = sphi 0, %s25
    %s42 = sphi 0, %s26
    %s46 = sphi 0, %s46
    %s48 = sphi 0, %s46
    %s49 = sphi 0, %s48
    %s63 = sphi 0, %s49
    %s67 = sphi 0, %s67
    %s69 = sphi 0, %s67
    %s70 = sphi 0, %s69
    %s84 = sphi 0, %s70
    %s88 = sphi 0, %s88
    %s90 = sphi 0, %s88
    %s91 = sphi 0, %s90
    %s105 = sphi 0, %s91
    %s111 = sphi 0, %s113
    %s114 = sphi 0, %s111
    %s115 = sphi 0, %s114
    %s131 = sphi 0, %s115
    %s135 = sphi 0, %s135
    %s137 = sphi 0, %s135
    %s138 = sphi 0, %s137
    %s152 = sphi 0, %s138
  $region4: #{double_conv.4} parent=0 // loop_header_branch
    %15 = sbr.rel (%p13) target = $region8
  $region5: #{double_conv.4} parent=0 // loop_body
    %s17 = ssub.s32 %s12, 1
    %s18 = ssub.s32 %s12, 2
    %s19 = sadd.s32 %s12, 1
    %s20 = ssub.s32 %s12, %s19
    %p21 = scmp.eq.s32.totalorder %s20, 0
    %s23 = sadd.s32 %s22, 1
    %s24 = scalar_select %p21, %s22, %s23
    %p27 = pneg %p21
    %p28 = scmp.eq.s32.totalorder %s12, 1
    %p29 = por %p27, %p28
    %p30 = scmp.ne.s32.totalorder %s22, %s25
    %p31 = scmp.eq.s32.totalorder %s12, 0
    %p32 = por %p30, %p31
    %p33 = scmp.ne.s32.totalorder %s22, %s25
    %p34 = scmp.eq.s32.totalorder %s17, 1
    %p35 = por %p33, %p34
    %p36 = scmp.ne.s32.totalorder %s25, %s26
    %p37 = scmp.eq.s32.totalorder %s17, 0
    %p38 = por %p36, %p37
    %p39 = scmp.ne.s32.totalorder %s25, %s26
    %p40 = scmp.eq.s32.totalorder %s18, 1
    %p41 = por %p39, %p40
    %p43 = scmp.ne.s32.totalorder %s26, %s42
    %p44 = scmp.eq.s32.totalorder %s18, 0
    %p45 = por %p43, %p44
    %s47 = sadd.s32 %s46, 1
    %p50 = scmp.eq.s32.totalorder %s12, 1
    %p51 = scmp.ne.s32.totalorder %s46, %s48
    %p52 = scmp.eq.s32.totalorder %s12, 0
    %p53 = por %p51, %p52
    %p54 = scmp.ne.s32.totalorder %s46, %s48
    %p55 = scmp.eq.s32.totalorder %s17, 1
    %p56 = por %p54, %p55
    %p57 = scmp.ne.s32.totalorder %s48, %s49
    %p58 = scmp.eq.s32.totalorder %s17, 0
    %p59 = por %p57, %p58
    %p60 = scmp.ne.s32.totalorder %s48, %s49
    %p61 = scmp.eq.s32.totalorder %s18, 1
    %p62 = por %p60, %p61
    %p64 = scmp.ne.s32.totalorder %s49, %s63
    %p65 = scmp.eq.s32.totalorder %s18, 0
    %p66 = por %p64, %p65
    %s68 = sadd.s32 %s67, 1
    %p71 = scmp.eq.s32.totalorder %s12, 1
    %p72 = scmp.ne.s32.totalorder %s67, %s69
    %p73 = scmp.eq.s32.totalorder %s12, 0
    %p74 = por %p72, %p73
    %p75 = scmp.ne.s32.totalorder %s67, %s69
    %p76 = scmp.eq.s32.totalorder %s17, 1
    %p77 = por %p75, %p76
    %p78 = scmp.ne.s32.totalorder %s69, %s70
    %p79 = scmp.eq.s32.totalorder %s17, 0
    %p80 = por %p78, %p79
    %p81 = scmp.ne.s32.totalorder %s69, %s70
    %p82 = scmp.eq.s32.totalorder %s18, 1
    %p83 = por %p81, %p82
    %p85 = scmp.ne.s32.totalorder %s70, %s84
    %p86 = scmp.eq.s32.totalorder %s18, 0
    %p87 = por %p85, %p86
    %s89 = sadd.s32 %s88, 1
    %p92 = scmp.eq.s32.totalorder %s12, 1
    %p93 = scmp.ne.s32.totalorder %s88, %s90
    %p94 = scmp.eq.s32.totalorder %s12, 0
    %p95 = por %p93, %p94
    %p96 = scmp.ne.s32.totalorder %s88, %s90
    %p97 = scmp.eq.s32.totalorder %s17, 1
    %p98 = por %p96, %p97
    %p99 = scmp.ne.s32.totalorder %s90, %s91
    %p100 = scmp.eq.s32.totalorder %s17, 0
    %p101 = por %p99, %p100
    %p102 = scmp.ne.s32.totalorder %s90, %s91
    %p103 = scmp.eq.s32.totalorder %s18, 1
    %p104 = por %p102, %p103
    %p106 = scmp.ne.s32.totalorder %s91, %s105
    %p107 = scmp.eq.s32.totalorder %s18, 0
    %p108 = por %p106, %p107
    %s109 = ssub.s32 %s12, %s19
    %p110 = scmp.eq.s32.totalorder %s109, 0
    %s112 = sadd.s32 %s111, 1
    %s113 = scalar_select %p110, %s111, %s112
    %p116 = pneg %p110
    %p117 = scmp.eq.s32.totalorder %s12, 1
    %p118 = por %p116, %p117
    %p119 = scmp.ne.s32.totalorder %s111, %s114
    %p120 = scmp.eq.s32.totalorder %s12, 0
    %p121 = por %p119, %p120
    %p122 = scmp.ne.s32.totalorder %s111, %s114
    %p123 = scmp.eq.s32.totalorder %s17, 1
    %p124 = por %p122, %p123
    %p125 = scmp.ne.s32.totalorder %s114, %s115
    %p126 = scmp.eq.s32.totalorder %s17, 0
    %p127 = por %p125, %p126
    %p128 = scmp.ne.s32.totalorder %s114, %s115
    %p129 = scmp.eq.s32.totalorder %s18, 1
    %p130 = por %p128, %p129
    %p132 = scmp.ne.s32.totalorder %s115, %s131
    %p133 = scmp.eq.s32.totalorder %s18, 0
    %p134 = por %p132, %p133
    %s136 = sadd.s32 %s135, 1
    %p139 = scmp.eq.s32.totalorder %s12, 1
    %p140 = scmp.ne.s32.totalorder %s135, %s137
    %p141 = scmp.eq.s32.totalorder %s12, 0
    %p142 = por %p140, %p141
    %p143 = scmp.ne.s32.totalorder %s135, %s137
    %p144 = scmp.eq.s32.totalorder %s17, 1
    %p145 = por %p143, %p144
    %p146 = scmp.ne.s32.totalorder %s137, %s138
    %p147 = scmp.eq.s32.totalorder %s17, 0
    %p148 = por %p146, %p147
    %p149 = scmp.ne.s32.totalorder %s137, %s138
    %p150 = scmp.eq.s32.totalorder %s18, 1
    %p151 = por %p149, %p150
    %p153 = scmp.ne.s32.totalorder %s138, %s152
    %p154 = scmp.eq.s32.totalorder %s18, 0
    %p155 = por %p153, %p154
    %p156 = scmp.le.s32.totalorder 1, %s12
    %p157 = scmp.lt.s32.totalorder %s12, 3
    %p158 = pnand %p156, %p157
    %p159 = pneg %p158
    // Predicated region
    $region9: #{double_conv.4} parent=5 // pred_check
      _
    $region10: #{double_conv.4} parent=5 // pred_check_branch
      %161 = sbr.rel (%p158) target = $region12
    $region11: #{double_conv.4} parent=5 // pred_region
      %s162 = ssub.s32 %s12, 1
      // Predicated region
      $region13: #{double_conv.4} parent=11 // pred_check
        %p163 = pneg %p59
      $region14: #{double_conv.4} parent=11 // pred_check_branch
        %165 = sbr.rel (%p163) target = $region16
      $region15: #{double_conv.4} parent=11 // pred_region
        _
      $region16: #{double_conv.4} parent=11 // pred_fallthru
        _
      // Predicated region
      $region17: #{double_conv.4} parent=11 // pred_check
        %p166 = pneg %p80
      $region18: #{double_conv.4} parent=11 // pred_check_branch
        %168 = sbr.rel (%p166) target = $region20
      $region19: #{double_conv.4} parent=11 // pred_region
        _
      $region20: #{double_conv.4} parent=11 // pred_fallthru
        _
      // Predicated region
      $region21: #{double_conv.4} parent=11 // pred_check
        %p169 = pneg %p101
      $region22: #{double_conv.4} parent=11 // pred_check_branch
        %171 = sbr.rel (%p169) target = $region24
      $region23: #{double_conv.4} parent=11 // pred_region
        _
      $region24: #{double_conv.4} parent=11 // pred_fallthru
        _
    $region12: #{double_conv.4} parent=5 // pred_fallthru
      _
    %p172 = scmp.lt.s32.totalorder %s12, 2
    // Predicated region
    $region25: #{double_conv.4} parent=5 // pred_check
      %p173 = pneg %p172
    $region26: #{double_conv.4} parent=5 // pred_check_branch
      %175 = sbr.rel (%p173) target = $region28
    $region27: #{double_conv.4} parent=5 // pred_region
      // Predicated region
      $region29: #{double_conv.4} parent=27 // pred_check
        %p176 = pneg %p32
      $region30: #{double_conv.4} parent=27 // pred_check_branch
        %178 = sbr.rel (%p176) target = $region32
      $region31: #{double_conv.4} parent=27 // pred_region
        %p179 = scmp.lt.s32.totalorder %s12, 1
        %s180 = scalar_select %p179, %s12, 1
        %s181 = smul.addr %s180, 32
        %s182 = smul.addr %s181, 8
        %s183 = scalar_lea.vmem %s0, %s182
      $region32: #{double_conv.4} parent=27 // pred_fallthru
        _
    $region28: #{double_conv.4} parent=5 // pred_fallthru
      _
    %p184 = scmp.le.s32.totalorder 1, %s12
    %p185 = scmp.lt.s32.totalorder %s12, 3
    %p186 = pnand %p184, %p185
    %p187 = pneg %p186
    // Predicated region
    $region33: #{double_conv.4} parent=5 // pred_check
      _
    $region34: #{double_conv.4} parent=5 // pred_check_branch
      %189 = sbr.rel (%p186) target = $region36
    $region35: #{double_conv.4} parent=5 // pred_region
      %s190 = ssub.s32 %s12, 1
      %p191 = scmp.lt.s32.totalorder %s17, 1
      %s192 = scalar_select %p191, %s17, 1
      %s193 = smul.addr %s192, 32
      %s194 = smul.addr %s193, 8
      %s195 = scalar_lea.vmem %s0, %s194
      %p196 = pneg %p38
      %p197 = pneg %p35
      %p198 = pneg %p59
      %p199 = pneg %p56
      %p200 = pneg %p80
      %p201 = pneg %p77
      %p202 = pneg %p101
      %p203 = pneg %p98
      %p204 = pneg %p127
      %p205 = pneg %p124
      %p206 = scmp.lt.s32.totalorder %s17, 1
      %s207 = scalar_select %p206, %s17, 1
      %s208 = smul.addr %s207, 32
      %s209 = smul.addr %s208, 8
      %s210 = scalar_lea.vmem %s4, %s209
      %p211 = pneg %p148
      %p212 = pneg %p145
      %p213 = scmp.lt.s32.totalorder %s17, 1
      %s214 = scalar_select %p213, %s17, 1
      %s215 = smul.addr %s214, 32
      %s216 = smul.addr %s215, 8
      %s217 = scalar_lea.vmem %s0, %s216
      %p218 = scmp.lt.s32.totalorder %s17, 1
      %s219 = scalar_select %p218, %s17, 1
      %s220 = smul.addr %s219, 32
      %s221 = smul.addr %s220, 8
      %s222 = scalar_lea.vmem %s4, %s221
      %p223 = scmp.eq.s32.totalorder %s17, 0
      // Predicated region
      $region37: #{double_conv.4} parent=35 // pred_check
        %p224 = pneg %p223
      $region38: #{double_conv.4} parent=35 // pred_check_branch
        %226 = sbr.rel (%p224) target = $region40
      $region39: #{double_conv.4} parent=35 // pred_region
        %vm227 = vcmask 58368
        %228 = vst.msk [vmem:[#allocation2] sm:$0x3] %vm227, 0.0
      $region40: #{double_conv.4} parent=35 // pred_fallthru
        _
      %v229 = vld [vmem:[%s1] sm:$0x1]
      %v230 = vld [vmem:[%s2] sm:$0x1]
      %v231 = vld [vmem:[%s217] sm:$0xff]
      %v232 = vld [vmem:[%s217 + $0x8] sm:$0xff]
      %v233 = vld [vmem:[%s217 + $0x10] sm:$0xff]
      %v234 = vld [vmem:[%s217 + $0x18] sm:$0xff]
      %v235 = vld [vmem:[%s217 + $0x20] sm:$0xff]
      %v236 = vld [vmem:[%s217 + $0x28] sm:$0xff]
      %v237 = vld [vmem:[%s217 + $0x30] sm:$0xff]
      %v238 = vld [vmem:[%s217 + $0x38] sm:$0xff]
      %v239 = vld [vmem:[%s217 + $0x40] sm:$0xff]
      %v240 = vld [vmem:[%s217 + $0x48] sm:$0xff]
      %v241 = vld [vmem:[%s217 + $0x50] sm:$0xff]
      %v242 = vld [vmem:[%s217 + $0x58] sm:$0xff]
      %v243 = vld [vmem:[%s217 + $0x60] sm:$0xff]
      %v244 = vld [vmem:[%s217 + $0x68] sm:$0xff]
      %v245 = vld [vmem:[%s217 + $0x70] sm:$0xff]
      %v246 = vld [vmem:[%s217 + $0x78] sm:$0xff]
      %v247 = vld [vmem:[%s217 + $0x80] sm:$0xff]
      %v248 = vld [vmem:[%s217 + $0x88] sm:$0xff]
      %v249 = vld [vmem:[%s217 + $0x90] sm:$0xff]
      %v250 = vld [vmem:[%s217 + $0x98] sm:$0xff]
      %v251 = vld [vmem:[%s217 + $0xa0] sm:$0xff]
      %v252 = vld [vmem:[%s217 + $0xa8] sm:$0xff]
      %v253 = vld [vmem:[%s217 + $0xb0] sm:$0xff]
      %v254 = vld [vmem:[%s217 + $0xb8] sm:$0xff]
      %v255 = vld [vmem:[%s217 + $0xc0] sm:$0xff]
      %v256 = vld [vmem:[%s217 + $0xc8] sm:$0xff]
      %v257 = vld [vmem:[%s217 + $0xd0] sm:$0xff]
      %v258 = vld [vmem:[%s217 + $0xd8] sm:$0xff]
      %v259 = vld [vmem:[%s217 + $0xe0] sm:$0xff]
      %v260 = vld [vmem:[%s217 + $0xe8] sm:$0xff]
      %v261 = vld [vmem:[%s217 + $0xf0] sm:$0xff]
      %v262 = vld [vmem:[%s217 + $0xf8] sm:$0xff]
      %v264 = vlaneseq
      %v265 = vshrl.u32 %v264, 7
      %v266 = vsub.s32 0, %v265
      %v267 = vrot.slane %v229, %v266
      %v269 = vmul.f32 %v231, %v267
      %v270 = vmul.f32 %v232, %v267
      %v271 = vmul.f32 %v233, %v267
      %v272 = vmul.f32 %v234, %v267
      %v273 = vmul.f32 %v235, %v267
      %v274 = vmul.f32 %v236, %v267
      %v275 = vmul.f32 %v237, %v267
      %v276 = vmul.f32 %v238, %v267
      %v277 = vmul.f32 %v239, %v267
      %v278 = vmul.f32 %v240, %v267
      %v279 = vmul.f32 %v241, %v267
      %v280 = vmul.f32 %v242, %v267
      %v281 = vmul.f32 %v243, %v267
      %v282 = vmul.f32 %v244, %v267
      %v283 = vmul.f32 %v245, %v267
      %v284 = vmul.f32 %v246, %v267
      %v285 = vmul.f32 %v247, %v267
      %v286 = vmul.f32 %v248, %v267
      %v287 = vmul.f32 %v249, %v267
      %v288 = vmul.f32 %v250, %v267
      %v289 = vmul.f32 %v251, %v267
      %v290 = vmul.f32 %v252, %v267
      %v291 = vmul.f32 %v253, %v267
      %v292 = vmul.f32 %v254, %v267
      %v293 = vmul.f32 %v255, %v267
      %v294 = vmul.f32 %v256, %v267
      %v295 = vmul.f32 %v257, %v267
      %v296 = vmul.f32 %v258, %v267
      %v297 = vmul.f32 %v259, %v267
      %v298 = vmul.f32 %v260, %v267
      %v299 = vmul.f32 %v261, %v267
      %v300 = vmul.f32 %v262, %v267
      %v302 = vlaneseq
      %v303 = vshrl.u32 %v302, 7
      %v304 = vsub.s32 0, %v303
      %v305 = vrot.slane %v230, %v304
      %v307 = vadd.f32 %v269, %v305
      %v308 = vadd.f32 %v270, %v305
      %v309 = vadd.f32 %v271, %v305
      %v310 = vadd.f32 %v272, %v305
      %v311 = vadd.f32 %v273, %v305
      %v312 = vadd.f32 %v274, %v305
      %v313 = vadd.f32 %v275, %v305
      %v314 = vadd.f32 %v276, %v305
      %v315 = vadd.f32 %v277, %v305
      %v316 = vadd.f32 %v278, %v305
      %v317 = vadd.f32 %v279, %v305
      %v318 = vadd.f32 %v280, %v305
      %v319 = vadd.f32 %v281, %v305
      %v320 = vadd.f32 %v282, %v305
      %v321 = vadd.f32 %v283, %v305
      %v322 = vadd.f32 %v284, %v305
      %v323 = vadd.f32 %v285, %v305
      %v324 = vadd.f32 %v286, %v305
      %v325 = vadd.f32 %v287, %v305
      %v326 = vadd.f32 %v288, %v305
      %v327 = vadd.f32 %v289, %v305
      %v328 = vadd.f32 %v290, %v305
      %v329 = vadd.f32 %v291, %v305
      %v330 = vadd.f32 %v292, %v305
      %v331 = vadd.f32 %v293, %v305
      %v332 = vadd.f32 %v294, %v305
      %v333 = vadd.f32 %v295, %v305
      %v334 = vadd.f32 %v296, %v305
      %v335 = vadd.f32 %v297, %v305
      %v336 = vadd.f32 %v298, %v305
      %v337 = vadd.f32 %v299, %v305
      %v338 = vadd.f32 %v300, %v305
      %v339 = vmax.f32 %v307, 0.0
      %v340 = vmax.f32 %v308, 0.0
      %v341 = vmax.f32 %v309, 0.0
      %v342 = vmax.f32 %v310, 0.0
      %v343 = vmax.f32 %v311, 0.0
      %v344 = vmax.f32 %v312, 0.0
      %v345 = vmax.f32 %v313, 0.0
      %v346 = vmax.f32 %v314, 0.0
      %v347 = vmax.f32 %v315, 0.0
      %v348 = vmax.f32 %v316, 0.0
      %v349 = vmax.f32 %v317, 0.0
      %v350 = vmax.f32 %v318, 0.0
      %v351 = vmax.f32 %v319, 0.0
      %v352 = vmax.f32 %v320, 0.0
      %v353 = vmax.f32 %v321, 0.0
      %v354 = vmax.f32 %v322, 0.0
      %v355 = vmax.f32 %v323, 0.0
      %v356 = vmax.f32 %v324, 0.0
      %v357 = vmax.f32 %v325, 0.0
      %v358 = vmax.f32 %v326, 0.0
      %v359 = vmax.f32 %v327, 0.0
      %v360 = vmax.f32 %v328, 0.0
      %v361 = vmax.f32 %v329, 0.0
      %v362 = vmax.f32 %v330, 0.0
      %v363 = vmax.f32 %v331, 0.0
      %v364 = vmax.f32 %v332, 0.0
      %v365 = vmax.f32 %v333, 0.0
      %v366 = vmax.f32 %v334, 0.0
      %v367 = vmax.f32 %v335, 0.0
      %v368 = vmax.f32 %v336, 0.0
      %v369 = vmax.f32 %v337, 0.0
      %v370 = vmax.f32 %v338, 0.0
      %vm403 = vcmask 1040384
      %v404 = vrot.slane %v339, 7
      %v405 = vrot.slane %v340, 7
      %v406 = vsel %vm403, %v404, %v405
      %v407 = vrot.slane %v341, 7
      %v408 = vrot.slane %v342, 7
      %v409 = vsel %vm403, %v407, %v408
      %v410 = vrot.slane %v343, 7
      %v411 = vrot.slane %v344, 7
      %v412 = vsel %vm403, %v410, %v411
      %v413 = vrot.slane %v345, 7
      %v414 = vrot.slane %v346, 7
      %v415 = vsel %vm403, %v413, %v414
      %v416 = vrot.slane %v347, 7
      %v417 = vrot.slane %v348, 7
      %v418 = vsel %vm403, %v416, %v417
      %v419 = vrot.slane %v349, 7
      %v420 = vrot.slane %v350, 7
      %v421 = vsel %vm403, %v419, %v420
      %v422 = vrot.slane %v351, 7
      %v423 = vrot.slane %v352, 7
      %v424 = vsel %vm403, %v422, %v423
      %v425 = vrot.slane %v353, 7
      %v426 = vrot.slane %v354, 7
      %v427 = vsel %vm403, %v425, %v426
      %v428 = vrot.slane %v355, 7
      %v429 = vrot.slane %v356, 7
      %v430 = vsel %vm403, %v428, %v429
      %v431 = vrot.slane %v357, 7
      %v432 = vrot.slane %v358, 7
      %v433 = vsel %vm403, %v431, %v432
      %v434 = vrot.slane %v359, 7
      %v435 = vrot.slane %v360, 7
      %v436 = vsel %vm403, %v434, %v435
      %v437 = vrot.slane %v361, 7
      %v438 = vrot.slane %v362, 7
      %v439 = vsel %vm403, %v437, %v438
      %v440 = vrot.slane %v363, 7
      %v441 = vrot.slane %v364, 7
      %v442 = vsel %vm403, %v440, %v441
      %v443 = vrot.slane %v365, 7
      %v444 = vrot.slane %v366, 7
      %v445 = vsel %vm403, %v443, %v444
      %v446 = vrot.slane %v367, 7
      %v447 = vrot.slane %v368, 7
      %v448 = vsel %vm403, %v446, %v447
      %v449 = vrot.slane %v369, 7
      %v450 = vrot.slane %v370, 7
      %v451 = vsel %vm403, %v449, %v450
      %v484 = vsel %vm403, 0.0, %v404
      %v485 = vsel %vm403, 0.0, %v407
      %v486 = vsel %vm403, 0.0, %v410
      %v487 = vsel %vm403, 0.0, %v413
      %v488 = vsel %vm403, 0.0, %v416
      %v489 = vsel %vm403, 0.0, %v419
      %v490 = vsel %vm403, 0.0, %v422
      %v491 = vsel %vm403, 0.0, %v425
      %v492 = vsel %vm403, 0.0, %v428
      %v493 = vsel %vm403, 0.0, %v431
      %v494 = vsel %vm403, 0.0, %v434
      %v495 = vsel %vm403, 0.0, %v437
      %v496 = vsel %vm403, 0.0, %v440
      %v497 = vsel %vm403, 0.0, %v443
      %v498 = vsel %vm403, 0.0, %v446
      %v499 = vsel %vm403, 0.0, %v449
      %vm500 = vcmask 1046528
      %v501 = vrot.slane %v339, 1
      %v502 = vrot.slane %v340, 1
      %v503 = vsel %vm500, %v501, %v502
      %v504 = vrot.slane %v341, 1
      %v505 = vrot.slane %v342, 1
      %v506 = vsel %vm500, %v504, %v505
      %v507 = vrot.slane %v343, 1
      %v508 = vrot.slane %v344, 1
      %v509 = vsel %vm500, %v507, %v508
      %v510 = vrot.slane %v345, 1
      %v511 = vrot.slane %v346, 1
      %v512 = vsel %vm500, %v510, %v511
      %v513 = vrot.slane %v347, 1
      %v514 = vrot.slane %v348, 1
      %v515 = vsel %vm500, %v513, %v514
      %v516 = vrot.slane %v349, 1
      %v517 = vrot.slane %v350, 1
      %v518 = vsel %vm500, %v516, %v517
      %v519 = vrot.slane %v351, 1
      %v520 = vrot.slane %v352, 1
      %v521 = vsel %vm500, %v519, %v520
      %v522 = vrot.slane %v353, 1
      %v523 = vrot.slane %v354, 1
      %v524 = vsel %vm500, %v522, %v523
      %v525 = vrot.slane %v355, 1
      %v526 = vrot.slane %v356, 1
      %v527 = vsel %vm500, %v525, %v526
      %v528 = vrot.slane %v357, 1
      %v529 = vrot.slane %v358, 1
      %v530 = vsel %vm500, %v528, %v529
      %v531 = vrot.slane %v359, 1
      %v532 = vrot.slane %v360, 1
      %v533 = vsel %vm500, %v531, %v532
      %v534 = vrot.slane %v361, 1
      %v535 = vrot.slane %v362, 1
      %v536 = vsel %vm500, %v534, %v535
      %v537 = vrot.slane %v363, 1
      %v538 = vrot.slane %v364, 1
      %v539 = vsel %vm500, %v537, %v538
      %v540 = vrot.slane %v365, 1
      %v541 = vrot.slane %v366, 1
      %v542 = vsel %vm500, %v540, %v541
      %v543 = vrot.slane %v367, 1
      %v544 = vrot.slane %v368, 1
      %v545 = vsel %vm500, %v543, %v544
      %v546 = vrot.slane %v369, 1
      %v547 = vrot.slane %v370, 1
      %v548 = vsel %vm500, %v546, %v547
      %v565 = vsel %vm500, %v502, 0.0
      %v566 = vsel %vm500, %v505, 0.0
      %v567 = vsel %vm500, %v508, 0.0
      %v568 = vsel %vm500, %v511, 0.0
      %v569 = vsel %vm500, %v514, 0.0
      %v570 = vsel %vm500, %v517, 0.0
      %v571 = vsel %vm500, %v520, 0.0
      %v572 = vsel %vm500, %v523, 0.0
      %v573 = vsel %vm500, %v526, 0.0
      %v574 = vsel %vm500, %v529, 0.0
      %v575 = vsel %vm500, %v532, 0.0
      %v576 = vsel %vm500, %v535, 0.0
      %v577 = vsel %vm500, %v538, 0.0
      %v578 = vsel %vm500, %v541, 0.0
      %v579 = vsel %vm500, %v544, 0.0
      %v580 = vsel %vm500, %v547, 0.0
      %581 = vrot.lane.b32.xlu0 %v339, 8
      %v582 = vpop.permute.xlu0 %581
      %583 = vrot.lane.b32.xlu0 %v340, 8
      %v584 = vpop.permute.xlu0 %583
      %585 = vrot.lane.b32.xlu0 %v341, 8
      %v586 = vpop.permute.xlu0 %585
      %587 = vrot.lane.b32.xlu0 %v342, 8
      %v588 = vpop.permute.xlu0 %587
      %589 = vrot.lane.b32.xlu0 %v343, 8
      %v590 = vpop.permute.xlu0 %589
      %591 = vrot.lane.b32.xlu0 %v344, 8
      %v592 = vpop.permute.xlu0 %591
      %593 = vrot.lane.b32.xlu0 %v345, 8
      %v594 = vpop.permute.xlu0 %593
      %595 = vrot.lane.b32.xlu0 %v346, 8
      %v596 = vpop.permute.xlu0 %595
      %597 = vrot.lane.b32.xlu0 %v347, 8
      %v598 = vpop.permute.xlu0 %597
      %599 = vrot.lane.b32.xlu0 %v348, 8
      %v600 = vpop.permute.xlu0 %599
      %601 = vrot.lane.b32.xlu0 %v349, 8
      %v602 = vpop.permute.xlu0 %601
      %603 = vrot.lane.b32.xlu0 %v350, 8
      %v604 = vpop.permute.xlu0 %603
      %605 = vrot.lane.b32.xlu0 %v351, 8
      %v606 = vpop.permute.xlu0 %605
      %607 = vrot.lane.b32.xlu0 %v352, 8
      %v608 = vpop.permute.xlu0 %607
      %609 = vrot.lane.b32.xlu0 %v353, 8
      %v610 = vpop.permute.xlu0 %609
      %611 = vrot.lane.b32.xlu0 %v354, 8
      %v612 = vpop.permute.xlu0 %611
      %613 = vrot.lane.b32.xlu0 %v355, 8
      %v614 = vpop.permute.xlu0 %613
      %615 = vrot.lane.b32.xlu0 %v356, 8
      %v616 = vpop.permute.xlu0 %615
      %617 = vrot.lane.b32.xlu0 %v357, 8
      %v618 = vpop.permute.xlu0 %617
      %619 = vrot.lane.b32.xlu0 %v358, 8
      %v620 = vpop.permute.xlu0 %619
      %621 = vrot.lane.b32.xlu0 %v359, 8
      %v622 = vpop.permute.xlu0 %621
      %623 = vrot.lane.b32.xlu0 %v360, 8
      %v624 = vpop.permute.xlu0 %623
      %625 = vrot.lane.b32.xlu0 %v361, 8
      %v626 = vpop.permute.xlu0 %625
      %627 = vrot.lane.b32.xlu0 %v362, 8
      %v628 = vpop.permute.xlu0 %627
      %629 = vrot.lane.b32.xlu0 %v363, 8
      %v630 = vpop.permute.xlu0 %629
      %631 = vrot.lane.b32.xlu0 %v364, 8
      %v632 = vpop.permute.xlu0 %631
      %633 = vrot.lane.b32.xlu0 %v365, 8
      %v634 = vpop.permute.xlu0 %633
      %635 = vrot.lane.b32.xlu0 %v366, 8
      %v636 = vpop.permute.xlu0 %635
      %637 = vrot.lane.b32.xlu0 %v367, 8
      %v638 = vpop.permute.xlu0 %637
      %639 = vrot.lane.b32.xlu0 %v368, 8
      %v640 = vpop.permute.xlu0 %639
      %641 = vrot.lane.b32.xlu0 %v369, 8
      %v642 = vpop.permute.xlu0 %641
      %643 = vrot.lane.b32.xlu0 %v370, 8
      %v644 = vpop.permute.xlu0 %643
      %693 = vrot.lane.b32.xlu0 %v503, 16
      %v694 = vpop.permute.xlu0 %693
      %695 = vrot.lane.b32.xlu0 %v565, 16
      %v696 = vpop.permute.xlu0 %695
      %697 = vrot.lane.b32.xlu0 %v506, 16
      %v698 = vpop.permute.xlu0 %697
      %699 = vrot.lane.b32.xlu0 %v566, 16
      %v700 = vpop.permute.xlu0 %699
      %701 = vrot.lane.b32.xlu0 %v509, 16
      %v702 = vpop.permute.xlu0 %701
      %703 = vrot.lane.b32.xlu0 %v567, 16
      %v704 = vpop.permute.xlu0 %703
      %705 = vrot.lane.b32.xlu0 %v512, 16
      %v706 = vpop.permute.xlu0 %705
      %707 = vrot.lane.b32.xlu0 %v568, 16
      %v708 = vpop.permute.xlu0 %707
      %709 = vrot.lane.b32.xlu0 %v515, 16
      %v710 = vpop.permute.xlu0 %709
      %711 = vrot.lane.b32.xlu0 %v569, 16
      %v712 = vpop.permute.xlu0 %711
      %713 = vrot.lane.b32.xlu0 %v518, 16
      %v714 = vpop.permute.xlu0 %713
      %715 = vrot.lane.b32.xlu0 %v570, 16
      %v716 = vpop.permute.xlu0 %715
      %717 = vrot.lane.b32.xlu0 %v521, 16
      %v718 = vpop.permute.xlu0 %717
      %719 = vrot.lane.b32.xlu0 %v571, 16
      %v720 = vpop.permute.xlu0 %719
      %721 = vrot.lane.b32.xlu0 %v524, 16
      %v722 = vpop.permute.xlu0 %721
      %723 = vrot.lane.b32.xlu0 %v572, 16
      %v724 = vpop.permute.xlu0 %723
      %725 = vrot.lane.b32.xlu0 %v527, 16
      %v726 = vpop.permute.xlu0 %725
      %727 = vrot.lane.b32.xlu0 %v573, 16
      %v728 = vpop.permute.xlu0 %727
      %729 = vrot.lane.b32.xlu0 %v530, 16
      %v730 = vpop.permute.xlu0 %729
      %731 = vrot.lane.b32.xlu0 %v574, 16
      %v732 = vpop.permute.xlu0 %731
      %733 = vrot.lane.b32.xlu0 %v533, 16
      %v734 = vpop.permute.xlu0 %733
      %735 = vrot.lane.b32.xlu0 %v575, 16
      %v736 = vpop.permute.xlu0 %735
      %737 = vrot.lane.b32.xlu0 %v536, 16
      %v738 = vpop.permute.xlu0 %737
      %739 = vrot.lane.b32.xlu0 %v576, 16
      %v740 = vpop.permute.xlu0 %739
      %741 = vrot.lane.b32.xlu0 %v539, 16
      %v742 = vpop.permute.xlu0 %741
      %743 = vrot.lane.b32.xlu0 %v577, 16
      %v744 = vpop.permute.xlu0 %743
      %745 = vrot.lane.b32.xlu0 %v542, 16
      %v746 = vpop.permute.xlu0 %745
      %747 = vrot.lane.b32.xlu0 %v578, 16
      %v748 = vpop.permute.xlu0 %747
      %749 = vrot.lane.b32.xlu0 %v545, 16
      %v750 = vpop.permute.xlu0 %749
      %751 = vrot.lane.b32.xlu0 %v579, 16
      %v752 = vpop.permute.xlu0 %751
      %753 = vrot.lane.b32.xlu0 %v548, 16
      %v754 = vpop.permute.xlu0 %753
      %755 = vrot.lane.b32.xlu0 %v580, 16
      %v756 = vpop.permute.xlu0 %755
      %vm789 = vcmask 64512
      %v790 = vsel %vm789, %v484, %v582
      %v791 = vsel %vm789, %v406, %v584
      %v792 = vsel %vm789, %v485, %v586
      %v793 = vsel %vm789, %v409, %v588
      %v794 = vsel %vm789, %v486, %v590
      %v795 = vsel %vm789, %v412, %v592
      %v796 = vsel %vm789, %v487, %v594
      %v797 = vsel %vm789, %v415, %v596
      %v798 = vsel %vm789, %v488, %v598
      %v799 = vsel %vm789, %v418, %v600
      %v800 = vsel %vm789, %v489, %v602
      %v801 = vsel %vm789, %v421, %v604
      %v802 = vsel %vm789, %v490, %v606
      %v803 = vsel %vm789, %v424, %v608
      %v804 = vsel %vm789, %v491, %v610
      %v805 = vsel %vm789, %v427, %v612
      %v806 = vsel %vm789, %v492, %v614
      %v807 = vsel %vm789, %v430, %v616
      %v808 = vsel %vm789, %v493, %v618
      %v809 = vsel %vm789, %v433, %v620
      %v810 = vsel %vm789, %v494, %v622
      %v811 = vsel %vm789, %v436, %v624
      %v812 = vsel %vm789, %v495, %v626
      %v813 = vsel %vm789, %v439, %v628
      %v814 = vsel %vm789, %v496, %v630
      %v815 = vsel %vm789, %v442, %v632
      %v816 = vsel %vm789, %v497, %v634
      %v817 = vsel %vm789, %v445, %v636
      %v818 = vsel %vm789, %v498, %v638
      %v819 = vsel %vm789, %v448, %v640
      %v820 = vsel %vm789, %v499, %v642
      %v821 = vsel %vm789, %v451, %v644
      %vm822 = vcmask 130048
      %v823 = vsel %vm822, %v790, %v694
      %v824 = vsel %vm822, %v791, %v696
      %v825 = vsel %vm822, %v792, %v698
      %v826 = vsel %vm822, %v793, %v700
      %v827 = vsel %vm822, %v794, %v702
      %v828 = vsel %vm822, %v795, %v704
      %v829 = vsel %vm822, %v796, %v706
      %v830 = vsel %vm822, %v797, %v708
      %v831 = vsel %vm822, %v798, %v710
      %v832 = vsel %vm822, %v799, %v712
      %v833 = vsel %vm822, %v800, %v714
      %v834 = vsel %vm822, %v801, %v716
      %v835 = vsel %vm822, %v802, %v718
      %v836 = vsel %vm822, %v803, %v720
      %v837 = vsel %vm822, %v804, %v722
      %v838 = vsel %vm822, %v805, %v724
      %v839 = vsel %vm822, %v806, %v726
      %v840 = vsel %vm822, %v807, %v728
      %v841 = vsel %vm822, %v808, %v730
      %v842 = vsel %vm822, %v809, %v732
      %v843 = vsel %vm822, %v810, %v734
      %v844 = vsel %vm822, %v811, %v736
      %v845 = vsel %vm822, %v812, %v738
      %v846 = vsel %vm822, %v813, %v740
      %v847 = vsel %vm822, %v814, %v742
      %v848 = vsel %vm822, %v815, %v744
      %v849 = vsel %vm822, %v816, %v746
      %v850 = vsel %vm822, %v817, %v748
      %v851 = vsel %vm822, %v818, %v750
      %v852 = vsel %vm822, %v819, %v752
      %v853 = vsel %vm822, %v820, %v754
      %v854 = vsel %vm822, %v821, %v756
      %887 = vrot.lane.b32.xlu0 %v823, 24
      %v888 = vpop.permute.xlu0 %887
      %889 = vrot.lane.b32.xlu0 %v824, 24
      %v890 = vpop.permute.xlu0 %889
      %891 = vrot.lane.b32.xlu0 %v825, 24
      %v892 = vpop.permute.xlu0 %891
      %893 = vrot.lane.b32.xlu0 %v826, 24
      %v894 = vpop.permute.xlu0 %893
      %895 = vrot.lane.b32.xlu0 %v827, 24
      %v896 = vpop.permute.xlu0 %895
      %897 = vrot.lane.b32.xlu0 %v828, 24
      %v898 = vpop.permute.xlu0 %897
      %899 = vrot.lane.b32.xlu0 %v829, 24
      %v900 = vpop.permute.xlu0 %899
      %901 = vrot.lane.b32.xlu0 %v830, 24
      %v902 = vpop.permute.xlu0 %901
      %903 = vrot.lane.b32.xlu0 %v831, 24
      %v904 = vpop.permute.xlu0 %903
      %905 = vrot.lane.b32.xlu0 %v832, 24
      %v906 = vpop.permute.xlu0 %905
      %907 = vrot.lane.b32.xlu0 %v833, 24
      %v908 = vpop.permute.xlu0 %907
      %909 = vrot.lane.b32.xlu0 %v834, 24
      %v910 = vpop.permute.xlu0 %909
      %911 = vrot.lane.b32.xlu0 %v835, 24
      %v912 = vpop.permute.xlu0 %911
      %913 = vrot.lane.b32.xlu0 %v836, 24
      %v914 = vpop.permute.xlu0 %913
      %915 = vrot.lane.b32.xlu0 %v837, 24
      %v916 = vpop.permute.xlu0 %915
      %917 = vrot.lane.b32.xlu0 %v838, 24
      %v918 = vpop.permute.xlu0 %917
      %919 = vrot.lane.b32.xlu0 %v839, 24
      %v920 = vpop.permute.xlu0 %919
      %921 = vrot.lane.b32.xlu0 %v840, 24
      %v922 = vpop.permute.xlu0 %921
      %923 = vrot.lane.b32.xlu0 %v841, 24
      %v924 = vpop.permute.xlu0 %923
      %925 = vrot.lane.b32.xlu0 %v842, 24
      %v926 = vpop.permute.xlu0 %925
      %927 = vrot.lane.b32.xlu0 %v843, 24
      %v928 = vpop.permute.xlu0 %927
      %929 = vrot.lane.b32.xlu0 %v844, 24
      %v930 = vpop.permute.xlu0 %929
      %931 = vrot.lane.b32.xlu0 %v845, 24
      %v932 = vpop.permute.xlu0 %931
      %933 = vrot.lane.b32.xlu0 %v846, 24
      %v934 = vpop.permute.xlu0 %933
      %935 = vrot.lane.b32.xlu0 %v847, 24
      %v936 = vpop.permute.xlu0 %935
      %937 = vrot.lane.b32.xlu0 %v848, 24
      %v938 = vpop.permute.xlu0 %937
      %939 = vrot.lane.b32.xlu0 %v849, 24
      %v940 = vpop.permute.xlu0 %939
      %941 = vrot.lane.b32.xlu0 %v850, 24
      %v942 = vpop.permute.xlu0 %941
      %943 = vrot.lane.b32.xlu0 %v851, 24
      %v944 = vpop.permute.xlu0 %943
      %945 = vrot.lane.b32.xlu0 %v852, 24
      %v946 = vpop.permute.xlu0 %945
      %947 = vrot.lane.b32.xlu0 %v853, 24
      %v948 = vpop.permute.xlu0 %947
      %949 = vrot.lane.b32.xlu0 %v854, 24
      %v950 = vpop.permute.xlu0 %949
      %984 = vrot.lane.b32.xlu0 %v825, 48
      %v985 = vpop.permute.xlu0 %984
      %986 = vrot.lane.b32.xlu0 %v826, 48
      %v987 = vpop.permute.xlu0 %986
      %988 = vrot.lane.b32.xlu0 %v827, 48
      %v989 = vpop.permute.xlu0 %988
      %990 = vrot.lane.b32.xlu0 %v828, 48
      %v991 = vpop.permute.xlu0 %990
      %992 = vrot.lane.b32.xlu0 %v829, 48
      %v993 = vpop.permute.xlu0 %992
      %994 = vrot.lane.b32.xlu0 %v830, 48
      %v995 = vpop.permute.xlu0 %994
      %996 = vrot.lane.b32.xlu0 %v831, 48
      %v997 = vpop.permute.xlu0 %996
      %998 = vrot.lane.b32.xlu0 %v832, 48
      %v999 = vpop.permute.xlu0 %998
      %1000 = vrot.lane.b32.xlu0 %v833, 48
      %v1001 = vpop.permute.xlu0 %1000
      %1002 = vrot.lane.b32.xlu0 %v834, 48
      %v1003 = vpop.permute.xlu0 %1002
      %1004 = vrot.lane.b32.xlu0 %v835, 48
      %v1005 = vpop.permute.xlu0 %1004
      %1006 = vrot.lane.b32.xlu0 %v836, 48
      %v1007 = vpop.permute.xlu0 %1006
      %1008 = vrot.lane.b32.xlu0 %v837, 48
      %v1009 = vpop.permute.xlu0 %1008
      %1010 = vrot.lane.b32.xlu0 %v838, 48
      %v1011 = vpop.permute.xlu0 %1010
      %1012 = vrot.lane.b32.xlu0 %v839, 48
      %v1013 = vpop.permute.xlu0 %1012
      %1014 = vrot.lane.b32.xlu0 %v840, 48
      %v1015 = vpop.permute.xlu0 %1014
      %1016 = vrot.lane.b32.xlu0 %v841, 48
      %v1017 = vpop.permute.xlu0 %1016
      %1018 = vrot.lane.b32.xlu0 %v842, 48
      %v1019 = vpop.permute.xlu0 %1018
      %1020 = vrot.lane.b32.xlu0 %v843, 48
      %v1021 = vpop.permute.xlu0 %1020
      %1022 = vrot.lane.b32.xlu0 %v844, 48
      %v1023 = vpop.permute.xlu0 %1022
      %1024 = vrot.lane.b32.xlu0 %v845, 48
      %v1025 = vpop.permute.xlu0 %1024
      %1026 = vrot.lane.b32.xlu0 %v846, 48
      %v1027 = vpop.permute.xlu0 %1026
      %1028 = vrot.lane.b32.xlu0 %v847, 48
      %v1029 = vpop.permute.xlu0 %1028
      %1030 = vrot.lane.b32.xlu0 %v848, 48
      %v1031 = vpop.permute.xlu0 %1030
      %1032 = vrot.lane.b32.xlu0 %v849, 48
      %v1033 = vpop.permute.xlu0 %1032
      %1034 = vrot.lane.b32.xlu0 %v850, 48
      %v1035 = vpop.permute.xlu0 %1034
      %1036 = vrot.lane.b32.xlu0 %v851, 48
      %v1037 = vpop.permute.xlu0 %1036
      %1038 = vrot.lane.b32.xlu0 %v852, 48
      %v1039 = vpop.permute.xlu0 %1038
      %1040 = vrot.lane.b32.xlu0 %v853, 48
      %v1041 = vpop.permute.xlu0 %1040
      %1042 = vrot.lane.b32.xlu0 %v854, 48
      %v1043 = vpop.permute.xlu0 %1042
      %1044 = vrot.lane.b32.xlu0 0.0, 48
      %v1045 = vpop.permute.xlu0 %1044
      %vm1077 = vcmask 195584
      %v1078 = vsel %vm1077, 0.0, %v888
      %v1079 = vsel %vm1077, 0.0, %v890
      %v1080 = vsel %vm1077, %v823, %v892
      %v1081 = vsel %vm1077, %v824, %v894
      %v1082 = vsel %vm1077, %v825, %v896
      %v1083 = vsel %vm1077, %v826, %v898
      %v1084 = vsel %vm1077, %v827, %v900
      %v1085 = vsel %vm1077, %v828, %v902
      %v1086 = vsel %vm1077, %v829, %v904
      %v1087 = vsel %vm1077, %v830, %v906
      %v1088 = vsel %vm1077, %v831, %v908
      %v1089 = vsel %vm1077, %v832, %v910
      %v1090 = vsel %vm1077, %v833, %v912
      %v1091 = vsel %vm1077, %v834, %v914
      %v1092 = vsel %vm1077, %v835, %v916
      %v1093 = vsel %vm1077, %v836, %v918
      %v1094 = vsel %vm1077, %v837, %v920
      %v1095 = vsel %vm1077, %v838, %v922
      %v1096 = vsel %vm1077, %v839, %v924
      %v1097 = vsel %vm1077, %v840, %v926
      %v1098 = vsel %vm1077, %v841, %v928
      %v1099 = vsel %vm1077, %v842, %v930
      %v1100 = vsel %vm1077, %v843, %v932
      %v1101 = vsel %vm1077, %v844, %v934
      %v1102 = vsel %vm1077, %v845, %v936
      %v1103 = vsel %vm1077, %v846, %v938
      %v1104 = vsel %vm1077, %v847, %v940
      %v1105 = vsel %vm1077, %v848, %v942
      %v1106 = vsel %vm1077, %v849, %v944
      %v1107 = vsel %vm1077, %v850, %v946
      %v1108 = vsel %vm1077, %v851, %v948
      %v1109 = vsel %vm1077, %v852, %v950
      %vm1110 = vcmask 392192
      %v1111 = vsel %vm1110, %v1078, %v985
      %v1112 = vsel %vm1110, %v1079, %v987
      %v1113 = vsel %vm1110, %v1080, %v989
      %v1114 = vsel %vm1110, %v1081, %v991
      %v1115 = vsel %vm1110, %v1082, %v993
      %v1116 = vsel %vm1110, %v1083, %v995
      %v1117 = vsel %vm1110, %v1084, %v997
      %v1118 = vsel %vm1110, %v1085, %v999
      %v1119 = vsel %vm1110, %v1086, %v1001
      %v1120 = vsel %vm1110, %v1087, %v1003
      %v1121 = vsel %vm1110, %v1088, %v1005
      %v1122 = vsel %vm1110, %v1089, %v1007
      %v1123 = vsel %vm1110, %v1090, %v1009
      %v1124 = vsel %vm1110, %v1091, %v1011
      %v1125 = vsel %vm1110, %v1092, %v1013
      %v1126 = vsel %vm1110, %v1093, %v1015
      %v1127 = vsel %vm1110, %v1094, %v1017
      %v1128 = vsel %vm1110, %v1095, %v1019
      %v1129 = vsel %vm1110, %v1096, %v1021
      %v1130 = vsel %vm1110, %v1097, %v1023
      %v1131 = vsel %vm1110, %v1098, %v1025
      %v1132 = vsel %vm1110, %v1099, %v1027
      %v1133 = vsel %vm1110, %v1100, %v1029
      %v1134 = vsel %vm1110, %v1101, %v1031
      %v1135 = vsel %vm1110, %v1102, %v1033
      %v1136 = vsel %vm1110, %v1103, %v1035
      %v1137 = vsel %vm1110, %v1104, %v1037
      %v1138 = vsel %vm1110, %v1105, %v1039
      %v1139 = vsel %vm1110, %v1106, %v1041
      %v1140 = vsel %vm1110, %v1107, %v1043
      %v1141 = vsel %vm1110, %v1108, %v1045
      %v1142 = vsel %vm1110, %v1109, %v1045
      %v1143 = vld [vmem:[%s3] sm:$0xff]
      %v1144 = vld [vmem:[%s3 + $0x8] sm:$0xff]
      %v1145 = vld [vmem:[%s3 + $0x10] sm:$0xff]
      %v1146 = vld [vmem:[%s3 + $0x18] sm:$0xff]
      %v1147 = vld [vmem:[%s3 + $0x20] sm:$0xff]
      %v1148 = vld [vmem:[%s3 + $0x28] sm:$0xff]
      %v1149 = vld [vmem:[%s3 + $0x30] sm:$0xff]
      %v1150 = vld [vmem:[%s3 + $0x38] sm:$0xff]
      %v1151 = vld [vmem:[%s3 + $0x40] sm:$0xff]
      %vm1152 = vcmask 588800
      %v1154 = vsel %vm1152, %v1111, 0
      %v1157 = vsel %vm1152, %v1112, 0
      %v1160 = vsel %vm1152, %v1113, 0
      %v1163 = vsel %vm1152, %v1114, 0
      %v1166 = vsel %vm1152, %v1115, 0
      %v1169 = vsel %vm1152, %v1116, 0
      %v1172 = vsel %vm1152, %v1117, 0
      %v1175 = vsel %vm1152, %v1118, 0
      %v1178 = vsel %vm1152, %v1119, 0
      %v1181 = vsel %vm1152, %v1120, 0
      %v1184 = vsel %vm1152, %v1121, 0
      %v1187 = vsel %vm1152, %v1122, 0
      %v1190 = vsel %vm1152, %v1123, 0
      %v1193 = vsel %vm1152, %v1124, 0
      %v1196 = vsel %vm1152, %v1125, 0
      %v1199 = vsel %vm1152, %v1126, 0
      %v1202 = vsel %vm1152, %v1127, 0
      %v1205 = vsel %vm1152, %v1128, 0
      %v1208 = vsel %vm1152, %v1129, 0
      %v1211 = vsel %vm1152, %v1130, 0
      %v1214 = vsel %vm1152, %v1131, 0
      %v1217 = vsel %vm1152, %v1132, 0
      %v1220 = vsel %vm1152, %v1133, 0
      %v1223 = vsel %vm1152, %v1134, 0
      %v1226 = vsel %vm1152, %v1135, 0
      %v1229 = vsel %vm1152, %v1136, 0
      %v1232 = vsel %vm1152, %v1137, 0
      %v1235 = vsel %vm1152, %v1138, 0
      %v1238 = vsel %vm1152, %v1139, 0
      %v1241 = vsel %vm1152, %v1140, 0
      %v1244 = vsel %vm1152, %v1141, 0
      %v1247 = vsel %vm1152, %v1142, 0
      %1249 = vmatprep.subr.mxu0 0.0
      %1250 = vmatpush1.msra.mxu0 0.0
      %1251 = vmatprep.subr.mxu0 0.0
      %1252 = vmatpush1.msra.mxu0 0.0
      %1253 = vmatprep.subr.mxu0 0.0
      %1254 = vmatpush1.msra.mxu0 0.0
      %1255 = vmatprep.subr.mxu0 0.0
      %1256 = vmatpush1.msra.mxu0 0.0
      %1257 = vmatprep.subr.mxu0 0.0
      %1258 = vmatpush1.msra.mxu0 0.0
      %1259 = vmatprep.subr.mxu0 0.0
      %1260 = vmatpush1.msra.mxu0 0.0
      %1261 = vmatprep.subr.mxu0 0.0
      %1262 = vmatpush1.msra.mxu0 0.0
      %1263 = vmatprep.subr.mxu0 0.0
      %1264 = vmatpush1.msra.mxu0 %v1151
      %1265 = vmatprep.subr.mxu0 0.0
      %1266 = vmatpush1.msra.mxu0 %v1150
      %1267 = vmatprep.subr.mxu0 0.0
      %1268 = vmatpush1.msra.mxu0 %v1149
      %1269 = vmatprep.subr.mxu0 0.0
      %1270 = vmatpush1.msra.mxu0 %v1148
      %1271 = vmatprep.subr.mxu0 0.0
      %1272 = vmatpush1.msra.mxu0 %v1147
      %1273 = vmatprep.subr.mxu0 0.0
      %1274 = vmatpush1.msra.mxu0 %v1146
      %1275 = vmatprep.subr.mxu0 0.0
      %1276 = vmatpush1.msra.mxu0 %v1145
      %1277 = vmatprep.subr.mxu0 0.0
      %1278 = vmatpush1.msra.mxu0 %v1144
      %1279 = vmatprep.subr.mxu0 0.0
      %1280 = vmatpush1.msra.mxu0 %v1143
      %1281 = vmatprep.subr.mxu0 0.0
      %1282 = vmatpush2.msra.mxu0 0.0
      %1283 = vmatprep.subr.mxu0 0.0
      %1284 = vmatpush2.msra.mxu0 0.0
      %1285 = vmatprep.subr.mxu0 0.0
      %1286 = vmatpush2.msra.mxu0 0.0
      %1287 = vmatprep.subr.mxu0 0.0
      %1288 = vmatpush2.msra.mxu0 0.0
      %1289 = vmatprep.subr.mxu0 0.0
      %1290 = vmatpush2.msra.mxu0 0.0
      %1291 = vmatprep.subr.mxu0 0.0
      %1292 = vmatpush2.msra.mxu0 0.0
      %1293 = vmatprep.subr.mxu0 0.0
      %1294 = vmatpush2.msra.mxu0 0.0
      %1295 = vmatprep.subr.mxu0 0.0
      %1296 = vmatpush2.msra.mxu0 0.0
      %1297 = vmatprep.subr.mxu0 0.0
      %1298 = vmatpush2.msra.mxu0 0.0
      %1299 = vmatprep.subr.mxu0 0.0
      %1300 = vmatpush2.msra.mxu0 0.0
      %1301 = vmatprep.subr.mxu0 0.0
      %1302 = vmatpush2.msra.mxu0 0.0
      %1303 = vmatprep.subr.mxu0 0.0
      %1304 = vmatpush2.msra.mxu0 0.0
      %1305 = vmatprep.subr.mxu0 0.0
      %1306 = vmatpush2.msra.mxu0 0.0
      %1307 = vmatprep.subr.mxu0 0.0
      %1308 = vmatpush2.msra.mxu0 0.0
      %1309 = vmatprep.subr.mxu0 0.0
      %1310 = vmatpush2.msra.mxu0 0.0
      %1311 = vmatprep.subr.mxu0 0.0
      %1312 = vmatpush2.msra.mxu0 0.0
      %1313 = vmatprep.mubr.f32.mxu0 0.0
      %1314 = vmatmul.mubr.f32.gmra.mxu0 %v1154
      %v1315 = vpop.f32.mrf.mxu0
      %v1316 = vadd.f32 0.0, %v1315
      %v1317 = vpop.f32.mrf.mxu0
      %1318 = vmatprep.mubr.f32.mxu0 0.0
      %1319 = vmatmul.mubr.f32.gmra.mxu0 %v1157
      %v1320 = vpop.f32.mrf.mxu0
      %v1321 = vadd.f32 0.0, %v1320
      %v1322 = vpop.f32.mrf.mxu0
      %1323 = vmatprep.mubr.f32.mxu0 0.0
      %1324 = vmatmul.mubr.f32.gmra.mxu0 %v1160
      %v1325 = vpop.f32.mrf.mxu0
      %v1326 = vadd.f32 0.0, %v1325
      %v1327 = vpop.f32.mrf.mxu0
      %1328 = vmatprep.mubr.f32.mxu0 0.0
      %1329 = vmatmul.mubr.f32.gmra.mxu0 %v1163
      %v1330 = vpop.f32.mrf.mxu0
      %v1331 = vadd.f32 0.0, %v1330
      %v1332 = vpop.f32.mrf.mxu0
      %1333 = vmatprep.mubr.f32.mxu0 0.0
      %1334 = vmatmul.mubr.f32.gmra.mxu0 %v1166
      %v1335 = vpop.f32.mrf.mxu0
      %v1336 = vadd.f32 0.0, %v1335
      %v1337 = vpop.f32.mrf.mxu0
      %1338 = vmatprep.mubr.f32.mxu0 0.0
      %1339 = vmatmul.mubr.f32.gmra.mxu0 %v1169
      %v1340 = vpop.f32.mrf.mxu0
      %v1341 = vadd.f32 0.0, %v1340
      %v1342 = vpop.f32.mrf.mxu0
      %1343 = vmatprep.mubr.f32.mxu0 0.0
      %1344 = vmatmul.mubr.f32.gmra.mxu0 %v1172
      %v1345 = vpop.f32.mrf.mxu0
      %v1346 = vadd.f32 0.0, %v1345
      %v1347 = vpop.f32.mrf.mxu0
      %1348 = vmatprep.mubr.f32.mxu0 0.0
      %1349 = vmatmul.mubr.f32.gmra.mxu0 %v1175
      %v1350 = vpop.f32.mrf.mxu0
      %v1351 = vadd.f32 0.0, %v1350
      %v1352 = vpop.f32.mrf.mxu0
      %1353 = vmatprep.mubr.f32.mxu0 0.0
      %1354 = vmatmul.mubr.f32.gmra.mxu0 %v1178
      %v1355 = vpop.f32.mrf.mxu0
      %v1356 = vadd.f32 0.0, %v1355
      %v1357 = vpop.f32.mrf.mxu0
      %1358 = vmatprep.mubr.f32.mxu0 0.0
      %1359 = vmatmul.mubr.f32.gmra.mxu0 %v1181
      %v1360 = vpop.f32.mrf.mxu0
      %v1361 = vadd.f32 0.0, %v1360
      %v1362 = vpop.f32.mrf.mxu0
      %1363 = vmatprep.mubr.f32.mxu0 0.0
      %1364 = vmatmul.mubr.f32.gmra.mxu0 %v1184
      %v1365 = vpop.f32.mrf.mxu0
      %v1366 = vadd.f32 0.0, %v1365
      %v1367 = vpop.f32.mrf.mxu0
      %1368 = vmatprep.mubr.f32.mxu0 0.0
      %1369 = vmatmul.mubr.f32.gmra.mxu0 %v1187
      %v1370 = vpop.f32.mrf.mxu0
      %v1371 = vadd.f32 0.0, %v1370
      %v1372 = vpop.f32.mrf.mxu0
      %1373 = vmatprep.mubr.f32.mxu0 0.0
      %1374 = vmatmul.mubr.f32.gmra.mxu0 %v1190
      %v1375 = vpop.f32.mrf.mxu0
      %v1376 = vadd.f32 0.0, %v1375
      %v1377 = vpop.f32.mrf.mxu0
      %1378 = vmatprep.mubr.f32.mxu0 0.0
      %1379 = vmatmul.mubr.f32.gmra.mxu0 %v1193
      %v1380 = vpop.f32.mrf.mxu0
      %v1381 = vadd.f32 0.0, %v1380
      %v1382 = vpop.f32.mrf.mxu0
      %1383 = vmatprep.mubr.f32.mxu0 0.0
      %1384 = vmatmul.mubr.f32.gmra.mxu0 %v1196
      %v1385 = vpop.f32.mrf.mxu0
      %v1386 = vadd.f32 0.0, %v1385
      %v1387 = vpop.f32.mrf.mxu0
      %1388 = vmatprep.mubr.f32.mxu0 0.0
      %1389 = vmatmul.mubr.f32.gmra.mxu0 %v1199
      %v1390 = vpop.f32.mrf.mxu0
      %v1391 = vadd.f32 0.0, %v1390
      %v1392 = vpop.f32.mrf.mxu0
      %1393 = vmatprep.mubr.f32.mxu0 0.0
      %1394 = vmatmul.mubr.f32.gmra.mxu0 %v1202
      %v1395 = vpop.f32.mrf.mxu0
      %v1396 = vadd.f32 0.0, %v1395
      %v1397 = vpop.f32.mrf.mxu0
      %1398 = vmatprep.mubr.f32.mxu0 0.0
      %1399 = vmatmul.mubr.f32.gmra.mxu0 %v1205
      %v1400 = vpop.f32.mrf.mxu0
      %v1401 = vadd.f32 0.0, %v1400
      %v1402 = vpop.f32.mrf.mxu0
      %1403 = vmatprep.mubr.f32.mxu0 0.0
      %1404 = vmatmul.mubr.f32.gmra.mxu0 %v1208
      %v1405 = vpop.f32.mrf.mxu0
      %v1406 = vadd.f32 0.0, %v1405
      %v1407 = vpop.f32.mrf.mxu0
      %1408 = vmatprep.mubr.f32.mxu0 0.0
      %1409 = vmatmul.mubr.f32.gmra.mxu0 %v1211
      %v1410 = vpop.f32.mrf.mxu0
      %v1411 = vadd.f32 0.0, %v1410
      %v1412 = vpop.f32.mrf.mxu0
      %1413 = vmatprep.mubr.f32.mxu0 0.0
      %1414 = vmatmul.mubr.f32.gmra.mxu0 %v1214
      %v1415 = vpop.f32.mrf.mxu0
      %v1416 = vadd.f32 0.0, %v1415
      %v1417 = vpop.f32.mrf.mxu0
      %1418 = vmatprep.mubr.f32.mxu0 0.0
      %1419 = vmatmul.mubr.f32.gmra.mxu0 %v1217
      %v1420 = vpop.f32.mrf.mxu0
      %v1421 = vadd.f32 0.0, %v1420
      %v1422 = vpop.f32.mrf.mxu0
      %1423 = vmatprep.mubr.f32.mxu0 0.0
      %1424 = vmatmul.mubr.f32.gmra.mxu0 %v1220
      %v1425 = vpop.f32.mrf.mxu0
      %v1426 = vadd.f32 0.0, %v1425
      %v1427 = vpop.f32.mrf.mxu0
      %1428 = vmatprep.mubr.f32.mxu0 0.0
      %1429 = vmatmul.mubr.f32.gmra.mxu0 %v1223
      %v1430 = vpop.f32.mrf.mxu0
      %v1431 = vadd.f32 0.0, %v1430
      %v1432 = vpop.f32.mrf.mxu0
      %1433 = vmatprep.mubr.f32.mxu0 0.0
      %1434 = vmatmul.mubr.f32.gmra.mxu0 %v1226
      %v1435 = vpop.f32.mrf.mxu0
      %v1436 = vadd.f32 0.0, %v1435
      %v1437 = vpop.f32.mrf.mxu0
      %1438 = vmatprep.mubr.f32.mxu0 0.0
      %1439 = vmatmul.mubr.f32.gmra.mxu0 %v1229
      %v1440 = vpop.f32.mrf.mxu0
      %v1441 = vadd.f32 0.0, %v1440
      %v1442 = vpop.f32.mrf.mxu0
      %1443 = vmatprep.mubr.f32.mxu0 0.0
      %1444 = vmatmul.mubr.f32.gmra.mxu0 %v1232
      %v1445 = vpop.f32.mrf.mxu0
      %v1446 = vadd.f32 0.0, %v1445
      %v1447 = vpop.f32.mrf.mxu0
      %1448 = vmatprep.mubr.f32.mxu0 0.0
      %1449 = vmatmul.mubr.f32.gmra.mxu0 %v1235
      %v1450 = vpop.f32.mrf.mxu0
      %v1451 = vadd.f32 0.0, %v1450
      %v1452 = vpop.f32.mrf.mxu0
      %1453 = vmatprep.mubr.f32.mxu0 0.0
      %1454 = vmatmul.mubr.f32.gmra.mxu0 %v1238
      %v1455 = vpop.f32.mrf.mxu0
      %v1456 = vadd.f32 0.0, %v1455
      %v1457 = vpop.f32.mrf.mxu0
      %1458 = vmatprep.mubr.f32.mxu0 0.0
      %1459 = vmatmul.mubr.f32.gmra.mxu0 %v1241
      %v1460 = vpop.f32.mrf.mxu0
      %v1461 = vadd.f32 0.0, %v1460
      %v1462 = vpop.f32.mrf.mxu0
      %1463 = vmatprep.mubr.f32.mxu0 0.0
      %1464 = vmatmul.mubr.f32.gmra.mxu0 %v1244
      %v1465 = vpop.f32.mrf.mxu0
      %v1466 = vadd.f32 0.0, %v1465
      %v1467 = vpop.f32.mrf.mxu0
      %1468 = vmatprep.mubr.f32.mxu0 0.0
      %1469 = vmatmul.mubr.f32.gmra.mxu0 %v1247
      %v1470 = vpop.f32.mrf.mxu0
      %v1471 = vadd.f32 0.0, %v1470
      %v1472 = vpop.f32.mrf.mxu0
      %1473 = vdwg.mxu0
      %1474 = vst.msk [vmem:[%s222] sm:$0xff] %vm789, %v1316
      %1475 = vst.msk [vmem:[%s222 + $0x8] sm:$0xff] %vm789, %v1321
      %1476 = vst.msk [vmem:[%s222 + $0x10] sm:$0xff] %vm789, %v1326
      %1477 = vst.msk [vmem:[%s222 + $0x18] sm:$0xff] %vm789, %v1331
      %1478 = vst.msk [vmem:[%s222 + $0x20] sm:$0xff] %vm789, %v1336
      %1479 = vst.msk [vmem:[%s222 + $0x28] sm:$0xff] %vm789, %v1341
      %1480 = vst.msk [vmem:[%s222 + $0x30] sm:$0xff] %vm789, %v1346
      %1481 = vst.msk [vmem:[%s222 + $0x38] sm:$0xff] %vm789, %v1351
      %1482 = vst.msk [vmem:[%s222 + $0x40] sm:$0xff] %vm789, %v1356
      %1483 = vst.msk [vmem:[%s222 + $0x48] sm:$0xff] %vm789, %v1361
      %1484 = vst.msk [vmem:[%s222 + $0x50] sm:$0xff] %vm789, %v1366
      %1485 = vst.msk [vmem:[%s222 + $0x58] sm:$0xff] %vm789, %v1371
      %1486 = vst.msk [vmem:[%s222 + $0x60] sm:$0xff] %vm789, %v1376
      %1487 = vst.msk [vmem:[%s222 + $0x68] sm:$0xff] %vm789, %v1381
      %1488 = vst.msk [vmem:[%s222 + $0x70] sm:$0xff] %vm789, %v1386
      %1489 = vst.msk [vmem:[%s222 + $0x78] sm:$0xff] %vm789, %v1391
      %1490 = vst.msk [vmem:[%s222 + $0x80] sm:$0xff] %vm789, %v1396
      %1491 = vst.msk [vmem:[%s222 + $0x88] sm:$0xff] %vm789, %v1401
      %1492 = vst.msk [vmem:[%s222 + $0x90] sm:$0xff] %vm789, %v1406
      %1493 = vst.msk [vmem:[%s222 + $0x98] sm:$0xff] %vm789, %v1411
      %1494 = vst.msk [vmem:[%s222 + $0xa0] sm:$0xff] %vm789, %v1416
      %1495 = vst.msk [vmem:[%s222 + $0xa8] sm:$0xff] %vm789, %v1421
      %1496 = vst.msk [vmem:[%s222 + $0xb0] sm:$0xff] %vm789, %v1426
      %1497 = vst.msk [vmem:[%s222 + $0xb8] sm:$0xff] %vm789, %v1431
      %1498 = vst.msk [vmem:[%s222 + $0xc0] sm:$0xff] %vm789, %v1436
      %1499 = vst.msk [vmem:[%s222 + $0xc8] sm:$0xff] %vm789, %v1441
      %1500 = vst.msk [vmem:[%s222 + $0xd0] sm:$0xff] %vm789, %v1446
      %1501 = vst.msk [vmem:[%s222 + $0xd8] sm:$0xff] %vm789, %v1451
      %1502 = vst.msk [vmem:[%s222 + $0xe0] sm:$0xff] %vm789, %v1456
      %1503 = vst.msk [vmem:[%s222 + $0xe8] sm:$0xff] %vm789, %v1461
      %1504 = vst.msk [vmem:[%s222 + $0xf0] sm:$0xff] %vm789, %v1466
      %1505 = vst.msk [vmem:[%s222 + $0xf8] sm:$0xff] %vm789, %v1471
      %v1506 = vsel %vm789, %v1316, 0.0
      %v1507 = vsel %vm789, %v1321, 0.0
      %v1508 = vadd.f32 %v1506, %v1507
      %v1509 = vsel %vm789, %v1326, 0.0
      %v1510 = vadd.f32 %v1508, %v1509
      %v1511 = vsel %vm789, %v1331, 0.0
      %v1512 = vadd.f32 %v1510, %v1511
      %v1513 = vsel %vm789, %v1336, 0.0
      %v1514 = vadd.f32 %v1512, %v1513
      %v1515 = vsel %vm789, %v1341, 0.0
      %v1516 = vadd.f32 %v1514, %v1515
      %v1517 = vsel %vm789, %v1346, 0.0
      %v1518 = vadd.f32 %v1516, %v1517
      %v1519 = vsel %vm789, %v1351, 0.0
      %v1520 = vadd.f32 %v1518, %v1519
      %v1521 = vsel %vm789, %v1356, 0.0
      %v1522 = vadd.f32 %v1520, %v1521
      %v1523 = vsel %vm789, %v1361, 0.0
      %v1524 = vadd.f32 %v1522, %v1523
      %v1525 = vsel %vm789, %v1366, 0.0
      %v1526 = vadd.f32 %v1524, %v1525
      %v1527 = vsel %vm789, %v1371, 0.0
      %v1528 = vadd.f32 %v1526, %v1527
      %v1529 = vsel %vm789, %v1376, 0.0
      %v1530 = vadd.f32 %v1528, %v1529
      %v1531 = vsel %vm789, %v1381, 0.0
      %v1532 = vadd.f32 %v1530, %v1531
      %v1533 = vsel %vm789, %v1386, 0.0
      %v1534 = vadd.f32 %v1532, %v1533
      %v1535 = vsel %vm789, %v1391, 0.0
      %v1536 = vadd.f32 %v1534, %v1535
      %v1537 = vsel %vm789, %v1396, 0.0
      %v1538 = vadd.f32 %v1536, %v1537
      %v1539 = vsel %vm789, %v1401, 0.0
      %v1540 = vadd.f32 %v1538, %v1539
      %v1541 = vsel %vm789, %v1406, 0.0
      %v1542 = vadd.f32 %v1540, %v1541
      %v1543 = vsel %vm789, %v1411, 0.0
      %v1544 = vadd.f32 %v1542, %v1543
      %v1545 = vsel %vm789, %v1416, 0.0
      %v1546 = vadd.f32 %v1544, %v1545
      %v1547 = vsel %vm789, %v1421, 0.0
      %v1548 = vadd.f32 %v1546, %v1547
      %v1549 = vsel %vm789, %v1426, 0.0
      %v1550 = vadd.f32 %v1548, %v1549
      %v1551 = vsel %vm789, %v1431, 0.0
      %v1552 = vadd.f32 %v1550, %v1551
      %v1553 = vsel %vm789, %v1436, 0.0
      %v1554 = vadd.f32 %v1552, %v1553
      %v1555 = vsel %vm789, %v1441, 0.0
      %v1556 = vadd.f32 %v1554, %v1555
      %v1557 = vsel %vm789, %v1446, 0.0
      %v1558 = vadd.f32 %v1556, %v1557
      %v1559 = vsel %vm789, %v1451, 0.0
      %v1560 = vadd.f32 %v1558, %v1559
      %v1561 = vsel %vm789, %v1456, 0.0
      %v1562 = vadd.f32 %v1560, %v1561
      %v1563 = vsel %vm789, %v1461, 0.0
      %v1564 = vadd.f32 %v1562, %v1563
      %v1565 = vsel %vm789, %v1466, 0.0
      %v1566 = vadd.f32 %v1564, %v1565
      %v1567 = vsel %vm789, %v1471, 0.0
      %v1568 = vadd.f32 %v1566, %v1567
      %v1569 = vrot.slane %v1568, 4
      %v1570 = vadd.f32 %v1568, %v1569
      %v1571 = vrot.slane %v1570, 2
      %v1572 = vadd.f32 %v1570, %v1571
      %v1573 = vrot.slane %v1572, 1
      %v1574 = vadd.f32 %v1572, %v1573
      %v1575 = vmul.f32 %v1316, %v1316
      %v1576 = vmul.f32 %v1321, %v1321
      %v1577 = vmul.f32 %v1326, %v1326
      %v1578 = vmul.f32 %v1331, %v1331
      %v1579 = vmul.f32 %v1336, %v1336
      %v1580 = vmul.f32 %v1341, %v1341
      %v1581 = vmul.f32 %v1346, %v1346
      %v1582 = vmul.f32 %v1351, %v1351
      %v1583 = vmul.f32 %v1356, %v1356
      %v1584 = vmul.f32 %v1361, %v1361
      %v1585 = vmul.f32 %v1366, %v1366
      %v1586 = vmul.f32 %v1371, %v1371
      %v1587 = vmul.f32 %v1376, %v1376
      %v1588 = vmul.f32 %v1381, %v1381
      %v1589 = vmul.f32 %v1386, %v1386
      %v1590 = vmul.f32 %v1391, %v1391
      %v1591 = vmul.f32 %v1396, %v1396
      %v1592 = vmul.f32 %v1401, %v1401
      %v1593 = vmul.f32 %v1406, %v1406
      %v1594 = vmul.f32 %v1411, %v1411
      %v1595 = vmul.f32 %v1416, %v1416
      %v1596 = vmul.f32 %v1421, %v1421
      %v1597 = vmul.f32 %v1426, %v1426
      %v1598 = vmul.f32 %v1431, %v1431
      %v1599 = vmul.f32 %v1436, %v1436
      %v1600 = vmul.f32 %v1441, %v1441
      %v1601 = vmul.f32 %v1446, %v1446
      %v1602 = vmul.f32 %v1451, %v1451
      %v1603 = vmul.f32 %v1456, %v1456
      %v1604 = vmul.f32 %v1461, %v1461
      %v1605 = vmul.f32 %v1466, %v1466
      %v1606 = vmul.f32 %v1471, %v1471
      %v1607 = vsel %vm789, %v1575, 0.0
      %v1608 = vsel %vm789, %v1576, 0.0
      %v1609 = vadd.f32 %v1607, %v1608
      %v1610 = vsel %vm789, %v1577, 0.0
      %v1611 = vadd.f32 %v1609, %v1610
      %v1612 = vsel %vm789, %v1578, 0.0
      %v1613 = vadd.f32 %v1611, %v1612
      %v1614 = vsel %vm789, %v1579, 0.0
      %v1615 = vadd.f32 %v1613, %v1614
      %v1616 = vsel %vm789, %v1580, 0.0
      %v1617 = vadd.f32 %v1615, %v1616
      %v1618 = vsel %vm789, %v1581, 0.0
      %v1619 = vadd.f32 %v1617, %v1618
      %v1620 = vsel %vm789, %v1582, 0.0
      %v1621 = vadd.f32 %v1619, %v1620
      %v1622 = vsel %vm789, %v1583, 0.0
      %v1623 = vadd.f32 %v1621, %v1622
      %v1624 = vsel %vm789, %v1584, 0.0
      %v1625 = vadd.f32 %v1623, %v1624
      %v1626 = vsel %vm789, %v1585, 0.0
      %v1627 = vadd.f32 %v1625, %v1626
      %v1628 = vsel %vm789, %v1586, 0.0
      %v1629 = vadd.f32 %v1627, %v1628
      %v1630 = vsel %vm789, %v1587, 0.0
      %v1631 = vadd.f32 %v1629, %v1630
      %v1632 = vsel %vm789, %v1588, 0.0
      %v1633 = vadd.f32 %v1631, %v1632
      %v1634 = vsel %vm789, %v1589, 0.0
      %v1635 = vadd.f32 %v1633, %v1634
      %v1636 = vsel %vm789, %v1590, 0.0
      %v1637 = vadd.f32 %v1635, %v1636
      %v1638 = vsel %vm789, %v1591, 0.0
      %v1639 = vadd.f32 %v1637, %v1638
      %v1640 = vsel %vm789, %v1592, 0.0
      %v1641 = vadd.f32 %v1639, %v1640
      %v1642 = vsel %vm789, %v1593, 0.0
      %v1643 = vadd.f32 %v1641, %v1642
      %v1644 = vsel %vm789, %v1594, 0.0
      %v1645 = vadd.f32 %v1643, %v1644
      %v1646 = vsel %vm789, %v1595, 0.0
      %v1647 = vadd.f32 %v1645, %v1646
      %v1648 = vsel %vm789, %v1596, 0.0
      %v1649 = vadd.f32 %v1647, %v1648
      %v1650 = vsel %vm789, %v1597, 0.0
      %v1651 = vadd.f32 %v1649, %v1650
      %v1652 = vsel %vm789, %v1598, 0.0
      %v1653 = vadd.f32 %v1651, %v1652
      %v1654 = vsel %vm789, %v1599, 0.0
      %v1655 = vadd.f32 %v1653, %v1654
      %v1656 = vsel %vm789, %v1600, 0.0
      %v1657 = vadd.f32 %v1655, %v1656
      %v1658 = vsel %vm789, %v1601, 0.0
      %v1659 = vadd.f32 %v1657, %v1658
      %v1660 = vsel %vm789, %v1602, 0.0
      %v1661 = vadd.f32 %v1659, %v1660
      %v1662 = vsel %vm789, %v1603, 0.0
      %v1663 = vadd.f32 %v1661, %v1662
      %v1664 = vsel %vm789, %v1604, 0.0
      %v1665 = vadd.f32 %v1663, %v1664
      %v1666 = vsel %vm789, %v1605, 0.0
      %v1667 = vadd.f32 %v1665, %v1666
      %v1668 = vsel %vm789, %v1606, 0.0
      %v1669 = vadd.f32 %v1667, %v1668
      %v1670 = vrot.slane %v1669, 4
      %v1671 = vadd.f32 %v1669, %v1670
      %v1672 = vrot.slane %v1671, 2
      %v1673 = vadd.f32 %v1671, %v1672
      %v1674 = vrot.slane %v1673, 1
      %v1675 = vadd.f32 %v1673, %v1674
      %v1676 = vld [vmem:[#allocation2] sm:$0x3]
      %v1677 = vsel %vm403, %v1574, %v1675
      %v1678 = vadd.f32 %v1676, %v1677
      %vm1679 = vcmask 58368
      %1680 = vst.msk [vmem:[#allocation2] sm:$0x3] %vm1679, %v1678
      %p1681 = scmp.eq.s32.totalorder %s17, 1
      // Predicated region
      $region41: #{double_conv.4} parent=35 // pred_check
        %p1682 = pneg %p1681
      $region42: #{double_conv.4} parent=35 // pred_check_branch
        %1684 = sbr.rel (%p1682) target = $region44
      $region43: #{double_conv.4} parent=35 // pred_region
        %v1685 = vld [vmem:[#allocation2] sm:$0x3]
        %1686 = vst.msk [vmem:[%s5] sm:$0x3] %vm1679, %v1685
      $region44: #{double_conv.4} parent=35 // pred_fallthru
        _
      %p1687 = scmp.lt.s32.totalorder %s17, 1
      %s1688 = scalar_select %p1687, %s17, 1
      %s1689 = smul.addr %s1688, 32
      %s1690 = smul.addr %s1689, 8
      %s1691 = scalar_lea.vmem %s4, %s1690
      // Predicated region
      $region45: #{double_conv.4} parent=35 // pred_check
        %p1692 = pneg %p124
      $region46: #{double_conv.4} parent=35 // pred_check_branch
        %1694 = sbr.rel (%p1692) target = $region48
      $region47: #{double_conv.4} parent=35 // pred_region
        _
      $region48: #{double_conv.4} parent=35 // pred_fallthru
        _
      // Predicated region
      $region49: #{double_conv.4} parent=35 // pred_check
        %p1695 = pneg %p145
      $region50: #{double_conv.4} parent=35 // pred_check_branch
        %1697 = sbr.rel (%p1695) target = $region52
      $region51: #{double_conv.4} parent=35 // pred_region
        _
      $region52: #{double_conv.4} parent=35 // pred_fallthru
        _
      // Predicated region
      $region53: #{double_conv.4} parent=35 // pred_check
        %p1698 = pneg %p145
      $region54: #{double_conv.4} parent=35 // pred_check_branch
        %1700 = sbr.rel (%p1698) target = $region56
      $region55: #{double_conv.4} parent=35 // pred_region
        _
      $region56: #{double_conv.4} parent=35 // pred_fallthru
        _
    $region36: #{double_conv.4} parent=5 // pred_fallthru
      _
    %p1701 = scmp.le.s32.totalorder 2, %s12
    // Predicated region
    $region57: #{double_conv.4} parent=5 // pred_check
      %p1702 = pneg %p1701
    $region58: #{double_conv.4} parent=5 // pred_check_branch
      %1704 = sbr.rel (%p1702) target = $region60
    $region59: #{double_conv.4} parent=5 // pred_region
      %s1705 = ssub.s32 %s12, 2
      // Predicated region
      $region61: #{double_conv.4} parent=59 // pred_check
        %p1706 = pneg %p130
      $region62: #{double_conv.4} parent=59 // pred_check_branch
        %1708 = sbr.rel (%p1706) target = $region64
      $region63: #{double_conv.4} parent=59 // pred_region
        %p1709 = scmp.lt.s32.totalorder %s18, 1
        %s1710 = scalar_select %p1709, %s18, 1
        %s1711 = smul.addr %s1710, 32
        %s1712 = smul.addr %s1711, 8
        %s1713 = scalar_lea.vmem %s4, %s1712
      $region64: #{double_conv.4} parent=59 // pred_fallthru
        _
    $region60: #{double_conv.4} parent=5 // pred_fallthru
      _
  $region6: #{double_conv.4} parent=0 // loop_footer
    %s16 = sadd.s32 1, %s12
  $region7: #{double_conv.4} parent=0 // loop_footer_branch
    %11 = sbr.rel target = $region3
  $region8: #{double_conv.4} parent=0 // loop_exit
    _

</llo_original>
